<compile_context>
chip_gen: v5e
topology: v5e:2x2
jax: 0.10.0
libtpu: 0.0.40
codegen_flags: <defaults>
</compile_context>

<pallas_src>
import jax
import jax.numpy as jnp
from jax.experimental import pallas as pl
from jax.experimental.pallas import tpu as pltpu

BN_EPS = 1e-5


def _cdiv(a, b):
    return -(-a // b)


def _round_up(n, m):
    return _cdiv(n, m) * m


# ---------- feature detection / hardware query ----------

def _detect_single_buffer():
    """Can we request single-buffering for constant-index blocks?"""
    if not hasattr(pl, "Buffered"):
        return False
    try:
        pl.BlockSpec((8, 128), lambda i, k: (0, 0), pipeline_mode=pl.Buffered(1))
        return True
    except Exception:
        return False


_SINGLE_BUFFER_OK = _detect_single_buffer()


def _hw_info():
    """Returns (vmem_capacity_bytes, default block_m) for the local TPU generation."""
    vmem_cap = None
    kind = ""
    try:
        kind = jax.devices()[0].device_kind.lower()
    except Exception:
        pass
    try:
        info = pltpu.get_tpu_info()
        v = getattr(info, "vmem_capacity_bytes", None)
        if v:
            vmem_cap = int(v)
        if not kind:
            kind = str(getattr(info, "chip_version", "")).lower()
    except Exception:
        pass
    if vmem_cap is None:
        if "v7" in kind:
            vmem_cap = 64 << 20
        elif any(t in kind for t in ("v4", "v5", "v6")):
            vmem_cap = 128 << 20
        else:
            vmem_cap = 64 << 20          # unknown chip: be conservative
    block_m = 128 if "v5" in kind else 256   # 128-wide MXU on v5e, 256 on v6e/v7x
    return vmem_cap, block_m


# ---------- kernel ----------

def _res_classifier_kernel(x_ref, w1_ref, b1_ref, w2_ref, b2_ref, out_ref, acc_ref):
    """acc += x_k @ w1'_k ; at last k:  out = relu(acc + b1') @ w2 + b2.

    BatchNorm (eval) and the fc1 bias are already folded into w1'/b1' by the wrapper.
    Dropout is identity in eval mode.
    """
    k = pl.program_id(1)

    @pl.when(k == 0)
    def _():
        acc_ref[...] = jnp.zeros_like(acc_ref)

    acc_ref[...] += jnp.dot(x_ref[...], w1_ref[...],
                            preferred_element_type=jnp.float32)

    @pl.when(k == pl.num_programs(1) - 1)
    def _():
        h = jnp.maximum(acc_ref[...] + b1_ref[...], 0.0)          # (bm,Hp)+(1,Hp), ReLU
        logit = jnp.dot(h.astype(w2_ref.dtype), w2_ref[...],
                        preferred_element_type=jnp.float32)
        out_ref[...] = (logit + b2_ref[...]).astype(out_ref.dtype)


# ---------- VMEM accounting ----------

def _vmem_estimate(bm, tk, Hp, Cp, wbytes, nK, single_buffer):
    res_buf = 1 if single_buffer else 2
    w1_buf = res_buf if nK == 1 else 2           # w1 changes per k-step when split
    return (bm * tk * wbytes * 2                 # x tile (double-buffered)
            + tk * Hp * wbytes * w1_buf          # folded w1
            + Hp * 4 * res_buf                   # folded bias (f32)
            + Hp * Cp * wbytes * res_buf         # w2
            + Cp * 4 * res_buf                   # b2 (f32)
            + bm * Cp * 4 * 2                    # output tile (f32, double-buffered)
            + bm * Hp * 4)                       # f32 accumulator scratch


# ---------- one-time parameter preparation (hoisted out of the hot path) ----------

def prepare_params(params, *, compute_dtype=jnp.bfloat16, block_m=None):
    """Fold eval-mode BN + fc1 bias into fc1, pad every feature axis to a multiple of
    128, cast weights to compute_dtype (biases stay f32) and pick the K-split / VMEM
    budget for the local TPU generation.  Do this ONCE and reuse for every forward."""
    vmem_cap, default_bm = _hw_info()
    if block_m is None:
        block_m = default_bm

    w1, b1 = params["w1"], params["b1"]                  # (D_in, H), (H,)
    gamma, beta = params["gamma"], params["beta"]
    mean, var = params["running_mean"], params["running_var"]
    w2, b2 = params["w2"], params["b2"]                  # (H, C), (C,)

    D_in, H = w1.shape
    C = w2.shape[1]
    Hp = _round_up(H, 128)          # 1000 -> 1024
    Cp = _round_up(C, 128)          # 47   -> 128
    Dp = _round_up(D_in, 128)

    wbytes = jnp.dtype(compute_dtype).itemsize
    cap = int(vmem_cap * 0.875)     # ~56 MiB on v7x, ~112 MiB on v5e/v6e

    # K-split: shrink the per-step (tk, Hp) w1 block until everything fits the budget.
    nK = 1
    while True:
        tk = _round_up(_cdiv(Dp, nK), 128)
        est = _vmem_estimate(block_m, tk, Hp, Cp, wbytes, nK, _SINGLE_BUFFER_OK)
        if est <= int(cap * 0.9) or tk <= 512:
            break
        nK *= 2
    Dp_total = nK * tk

    # ---- Fold eval-mode BatchNorm (+ fc1 bias) into the fc1 weights. ----
    scale = gamma * jax.lax.rsqrt(var + BN_EPS)          # (H,)
    w1_f = w1 * scale[None, :]                           # (D_in, H)
    b1_f = (b1 - mean) * scale + beta                    # (H,)

    w1_p = jnp.pad(w1_f, ((0, Dp_total - D_in), (0, Hp - H))).astype(compute_dtype)
    b1_p = jnp.pad(b1_f, (0, Hp - H)).reshape(1, Hp).astype(jnp.float32)
    w2_p = jnp.pad(w2, ((0, Hp - H), (0, Cp - C))).astype(compute_dtype)
    b2_p = jnp.pad(b2, (0, Cp - C)).reshape(1, Cp).astype(jnp.float32)

    return {
        "_prepared": True,
        "w1_p": w1_p, "b1_p": b1_p, "w2_p": w2_p, "b2_p": b2_p,
        "_meta": dict(D_in=D_in, H=H, C=C, Dp=Dp_total, Hp=Hp, Cp=Cp,
                      tk=tk, nK=nK, block_m=block_m, vmem_cap=vmem_cap,
                      compute_dtype=jnp.dtype(compute_dtype), wbytes=wbytes),
    }


# ---------- pallas_call construction ----------

def _build_call(bm, tk, nK, Hp, Cp, B_pad, Dp, compute_dtype, batch_sem,
                vmem_limit, single_buffer):
    n_b = B_pad // bm

    def resident(shape):
        if single_buffer:
            return pl.BlockSpec(shape, lambda i, k: (0, 0),
                                pipeline_mode=pl.Buffered(1))
        return pl.BlockSpec(shape, lambda i, k: (0, 0))

    if nK == 1 and single_buffer:     # w1 block is constant only when K is not split
        w1_spec = pl.BlockSpec((tk, Hp), lambda i, k: (k, 0),
                               pipeline_mode=pl.Buffered(1))
    else:
        w1_spec = pl.BlockSpec((tk, Hp), lambda i, k: (k, 0))

    wbytes = jnp.dtype(compute_dtype).itemsize
    flops = 2 * B_pad * (Dp * Hp + Hp * Cp)
    bytes_accessed = (B_pad * Dp * wbytes + Dp * Hp * wbytes + Hp * 4
                      + Hp * Cp * wbytes + Cp * 4 + B_pad * Cp * 4)

    return pl.pallas_call(
        _res_classifier_kernel,
        out_shape=jax.ShapeDtypeStruct((B_pad, Cp), jnp.float32),
        grid=(n_b, nK),
        in_specs=[
            pl.BlockSpec((bm, tk), lambda i, k: (i, k)),   # x tile (batch, K)
            w1_spec,                                       # folded W1
            resident((1, Hp)),                             # folded bias (f32)
            resident((Hp, Cp)),                            # W2
            resident((1, Cp)),                             # b2 (f32)
        ],
        out_specs=pl.BlockSpec((bm, Cp), lambda i, k: (i, 0)),
        scratch_shapes=[pltpu.VMEM((bm, Hp), jnp.float32)],
        compiler_params=pltpu.CompilerParams(
            dimension_semantics=(batch_sem, "arbitrary"),
            vmem_limit_bytes=vmem_limit,
        ),
        cost_estimate=pl.CostEstimate(flops=flops, transcendentals=0,
                                      bytes_accessed=bytes_accessed),
    )


# ---------- hot-path forward ----------

def res_classifier_forward(x, params, *, block_m=None, compute_dtype=jnp.bfloat16):
    """Eval-mode forward: relu(BN(x @ W1 + b1)) @ W2 + b2 (Dropout = identity).

    `params` is either the raw weight dict (auto-prepared each call — slow path) or,
    preferably, the output of prepare_params().  Returns (B, class_num) float32 logits.
    """
    if not params.get("_prepared", False):
        params = prepare_params(params, compute_dtype=compute_dtype, block_m=block_m)
    meta = params["_meta"]
    B, D_in = x.shape
    assert D_in == meta["D_in"], "input feature dim mismatch"

    compute_dtype = meta["compute_dtype"]
    bm_cap = meta["block_m"] if block_m is None else block_m
    row_align = 16 if compute_dtype == jnp.bfloat16 else 8   # bf16 packs 2 rows/sublane

    # Batch tiling: minimal padding; even step count balances v7x's two TensorCores;
    # tiny batches use one "arbitrary" tile so the resident weights are DMA'd once.
    if B <= bm_cap:
        n_steps = 1
    else:
        n_steps = _cdiv(B, bm_cap)
        if n_steps % 2:
            n_steps += 1
    bm = _round_up(_cdiv(B, n_steps), row_align)
    B_pad = n_steps * bm
    batch_sem = "parallel" if n_steps > 1 else "arbitrary"

    Dp, Hp, Cp = meta["Dp"], meta["Hp"], meta["Cp"]
    tk, nK = meta["tk"], meta["nK"]

    # Hot path: only x is padded / cast per call.
    x_p = jnp.pad(x, ((0, B_pad - B), (0, Dp - D_in))).astype(compute_dtype)

    cap = int(meta["vmem_cap"] * 0.875)
    est = _vmem_estimate(bm, tk, Hp, Cp, meta["wbytes"], nK, _SINGLE_BUFFER_OK)
    vmem_limit = int(min(cap, max(est * 3 // 2 + (4 << 20), 32 << 20)))

    def _run(single_buffer):
        call = _build_call(bm, tk, nK, Hp, Cp, B_pad, Dp, compute_dtype,
                           batch_sem, vmem_limit, single_buffer)
        return call(x_p, params["w1_p"], params["b1_p"],
                    params["w2_p"], params["b2_p"])

    if _SINGLE_BUFFER_OK:
        try:
            out_padded = _run(True)
        except Exception:
            # Fall back to default double-buffering if Buffered(1) is rejected.
            out_padded = _run(False)
    else:
        out_padded = _run(False)

    return out_padded[:B, :meta["C"]]


# ---------- reference & init ----------

def init_params(key, input_dim, hidden, class_num):
    """PyTorch-style uniform fan-in init, with non-trivial BN affine/running stats so
    the BN fold is actually exercised."""
    k1, k2, k3, k4, k5, k6, k7, k8 = jax.random.split(key, 8)
    lim1 = 1.0 / jnp.sqrt(input_dim)
    lim2 = 1.0 / jnp.sqrt(hidden)
    return {
        "w1": jax.random.uniform(k1, (input_dim, hidden), jnp.float32, -lim1, lim1),
        "b1": jax.random.uniform(k2, (hidden,), jnp.float32, -lim1, lim1),
        "gamma": jax.random.uniform(k5, (hidden,), jnp.float32, 0.5, 1.5),
        "beta": 0.1 * jax.random.normal(k6, (hidden,), jnp.float32),
        "running_mean": 0.1 * jax.random.normal(k7, (hidden,), jnp.float32),
        "running_var": jax.random.uniform(k8, (hidden,), jnp.float32, 0.5, 1.5),
        "w2": jax.random.uniform(k3, (hidden, class_num), jnp.float32, -lim2, lim2),
        "b2": jax.random.uniform(k4, (class_num,), jnp.float32, -lim2, lim2),
    }


def _reference_forward(x, p):
    h = x @ p["w1"] + p["b1"]
    h = (h - p["running_mean"]) * jax.lax.rsqrt(p["running_var"] + BN_EPS) \
        * p["gamma"] + p["beta"]
    h = jnp.maximum(h, 0.0)
    return h @ p["w2"] + p["b2"]


if __name__ == "__main__":
    # Small shapes consistent with the module (hidden=1000 is hard-coded by ResClassifier,
    # class_num defaults to 47; input_dim is a constructor arg we shrink for the demo).
    B, D_IN, HIDDEN, CLASS_NUM = 8, 32, 1000, 47

    key = jax.random.PRNGKey(0)
    kx, kx2, kp = jax.random.split(key, 3)
    x = jax.random.normal(kx, (B, D_IN), dtype=jnp.float32)
    params = init_params(kp, D_IN, HIDDEN, CLASS_NUM)
    ref = _reference_forward(x, params)

    # f32 compute path (near-exact vs reference despite the BN fold).
    prep_f32 = prepare_params(params, compute_dtype=jnp.float32)
    logits_f32 = jax.block_until_ready(res_classifier_forward(x, prep_f32))
    assert logits_f32.shape == (B, CLASS_NUM)
    assert jnp.allclose(logits_f32, ref, atol=1e-4, rtol=1e-4), "f32 mismatch vs reference"

    # Default bf16-compute / f32-accumulate fast path.
    prep_bf16 = prepare_params(params)   # compute_dtype defaults to bfloat16
    logits_bf16 = jax.block_until_ready(res_classifier_forward(x, prep_bf16))
    assert logits_bf16.shape == (B, CLASS_NUM)
    assert jnp.allclose(logits_bf16, ref, atol=5e-2, rtol=5e-2), "bf16 mismatch vs reference"

    # Multi-tile parallel batch grid (small block_m override just to exercise the path).
    B2 = 40
    x2 = jax.random.normal(kx2, (B2, D_IN), dtype=jnp.float32)
    ref2 = _reference_forward(x2, params)
    logits2 = jax.block_until_ready(res_classifier_forward(x2, prep_bf16, block_m=16))
    assert logits2.shape == (B2, CLASS_NUM)
    assert jnp.allclose(logits2, ref2, atol=5e-2, rtol=5e-2), "bf16 multi-tile mismatch"

    print("KERNEL_OK")
</pallas_src>

<mosaic_0001>
module attributes {stable_mosaic.version = 11 : i64} {
  func.func @_res_classifier_kernel(%arg0: i32, %arg1: i32, %arg2: memref<8x128xf32, #tpu.memory_space<vmem>>, %arg3: memref<128x1024xf32, #tpu.memory_space<vmem>>, %arg4: memref<1x1024xf32, #tpu.memory_space<vmem>>, %arg5: memref<1024x128xf32, #tpu.memory_space<vmem>>, %arg6: memref<1x128xf32, #tpu.memory_space<vmem>>, %arg7: memref<8x128xf32, #tpu.memory_space<vmem>>, %arg8: memref<8x1024xf32, #tpu.memory_space<vmem>>) attributes {dimension_semantics = [#tpu.dimension_semantics<arbitrary>, #tpu.dimension_semantics<arbitrary>], iteration_bounds = array<i64: 1, 1>, scalar_prefetch = 0 : i64, scratch_operands = 1 : i64, tpu.core_type = #tpu.core_type<tc>, window_params = [{transform_indices = @transform_0, window_bounds = array<i64: 8, 128>}, {pipeline_mode = #tpu.pipeline_mode<synchronous>, transform_indices = @transform_1, window_bounds = array<i64: 128, 1024>}, {pipeline_mode = #tpu.pipeline_mode<synchronous>, transform_indices = @transform_2, window_bounds = array<i64: 1, 1024>}, {pipeline_mode = #tpu.pipeline_mode<synchronous>, transform_indices = @transform_3, window_bounds = array<i64: 1024, 128>}, {pipeline_mode = #tpu.pipeline_mode<synchronous>, transform_indices = @transform_4, window_bounds = array<i64: 1, 128>}, {transform_indices = @transform_5, window_bounds = array<i64: 8, 128>}]} {
    %c0_i32 = arith.constant 0 : i32
    %0 = arith.cmpi eq, %arg1, %c0_i32 : i32
    %1 = arith.extui %0 : i1 to i32
    %c0_i32_0 = arith.constant 0 : i32
    %2 = arith.cmpi ne, %1, %c0_i32_0 : i32
    scf.if %2 {
      %cst_10 = arith.constant 0.000000e+00 : f32
      %12 = vector.broadcast %cst_10 : f32 to vector<8x1024xf32>
      %c0_11 = arith.constant 0 : index
      %c0_12 = arith.constant 0 : index
      %13 = vector.load %arg8[%c0_11, %c0_12] : memref<8x1024xf32, #tpu.memory_space<vmem>>, vector<8x1024xf32>
      tpu.vector_store %arg8[%c0_11, %c0_12], %12 {strides = array<i32>} : memref<8x1024xf32, #tpu.memory_space<vmem>>, vector<8x1024xf32>,
    } else {
    }
    %c0 = arith.constant 0 : index
    %c0_1 = arith.constant 0 : index
    %3 = vector.load %arg8[%c0, %c0_1] : memref<8x1024xf32, #tpu.memory_space<vmem>>, vector<8x1024xf32>
    %c0_2 = arith.constant 0 : index
    %c0_3 = arith.constant 0 : index
    %4 = vector.load %arg2[%c0_2, %c0_3] : memref<8x128xf32, #tpu.memory_space<vmem>>, vector<8x128xf32>
    %c0_4 = arith.constant 0 : index
    %c0_5 = arith.constant 0 : index
    %5 = vector.load %arg3[%c0_4, %c0_5] : memref<128x1024xf32, #tpu.memory_space<vmem>>, vector<128x1024xf32>
    %cst = arith.constant dense<0.000000e+00> : vector<8x1024xf32>
    %6 = tpu.matmul %4, %5, %cst {dimension_numbers = #tpu.dot_dimension_numbers<[1], [0], [0], [1], [0, 0, 1, 1], [], []>} : vector<8x128xf32>, vector<128x1024xf32>, vector<8x1024xf32> -> vector<8x1024xf32>
    %7 = arith.addf %3, %6 : vector<8x1024xf32>
    %c0_6 = arith.constant 0 : index
    %c0_7 = arith.constant 0 : index
    %8 = vector.load %arg8[%c0_6, %c0_7] : memref<8x1024xf32, #tpu.memory_space<vmem>>, vector<8x1024xf32>
    tpu.vector_store %arg8[%c0_6, %c0_7], %7 {strides = array<i32>} : memref<8x1024xf32, #tpu.memory_space<vmem>>, vector<8x1024xf32>,
    %c0_i32_8 = arith.constant 0 : i32
    %9 = arith.cmpi eq, %arg1, %c0_i32_8 : i32
    %10 = arith.extui %9 : i1 to i32
    %c0_i32_9 = arith.constant 0 : i32
    %11 = arith.cmpi ne, %10, %c0_i32_9 : i32
    scf.if %11 {
      %c0_10 = arith.constant 0 : index
      %c0_11 = arith.constant 0 : index
      %12 = vector.load %arg8[%c0_10, %c0_11] : memref<8x1024xf32, #tpu.memory_space<vmem>>, vector<8x1024xf32>
      %c0_12 = arith.constant 0 : index
      %c0_13 = arith.constant 0 : index
      %13 = vector.load %arg4[%c0_12, %c0_13] : memref<1x1024xf32, #tpu.memory_space<vmem>>, vector<1x1024xf32>
      %14 = vector.broadcast %13 : vector<1x1024xf32> to vector<8x1024xf32>
      %15 = arith.addf %12, %14 : vector<8x1024xf32>
      %cst_14 = arith.constant 0.000000e+00 : f32
      %16 = vector.broadcast %cst_14 : f32 to vector<8x1024xf32>
      %17 = arith.maximumf %15, %16 : vector<8x1024xf32>
      %c0_15 = arith.constant 0 : index
      %c0_16 = arith.constant 0 : index
      %18 = vector.load %arg5[%c0_15, %c0_16] : memref<1024x128xf32, #tpu.memory_space<vmem>>, vector<1024x128xf32>
      %cst_17 = arith.constant dense<0.000000e+00> : vector<8x128xf32>
      %19 = tpu.matmul %17, %18, %cst_17 {dimension_numbers = #tpu.dot_dimension_numbers<[1], [0], [0], [1], [0, 0, 1, 1], [], []>} : vector<8x1024xf32>, vector<1024x128xf32>, vector<8x128xf32> -> vector<8x128xf32>
      %c0_18 = arith.constant 0 : index
      %c0_19 = arith.constant 0 : index
      %20 = vector.load %arg6[%c0_18, %c0_19] : memref<1x128xf32, #tpu.memory_space<vmem>>, vector<1x128xf32>
      %21 = vector.broadcast %20 : vector<1x128xf32> to vector<8x128xf32>
      %22 = arith.addf %19, %21 : vector<8x128xf32>
      %c0_20 = arith.constant 0 : index
      %c0_21 = arith.constant 0 : index
      %23 = vector.load %arg7[%c0_20, %c0_21] : memref<8x128xf32, #tpu.memory_space<vmem>>, vector<8x128xf32>
      tpu.vector_store %arg7[%c0_20, %c0_21], %22 {strides = array<i32>} : memref<8x128xf32, #tpu.memory_space<vmem>>, vector<8x128xf32>,
    } else {
    }
    return
  }
  func.func @transform_0(%arg0: i32, %arg1: i32) -> (i32, i32) {
    %c0_i32 = arith.constant 0 : i32
    return %arg0, %arg1 : i32, i32
  }
  func.func @transform_1(%arg0: i32, %arg1: i32) -> (i32, i32) {
    %c0_i32 = arith.constant 0 : i32
    %c0_i32_0 = arith.constant 0 : i32
    return %arg1, %c0_i32 : i32, i32
  }
  func.func @transform_2(%arg0: i32, %arg1: i32) -> (i32, i32) {
    %c0_i32 = arith.constant 0 : i32
    %c0_i32_0 = arith.constant 0 : i32
    %c0_i32_1 = arith.constant 0 : i32
    return %c0_i32, %c0_i32_0 : i32, i32
  }
  func.func @transform_3(%arg0: i32, %arg1: i32) -> (i32, i32) {
    %c0_i32 = arith.constant 0 : i32
    %c0_i32_0 = arith.constant 0 : i32
    %c0_i32_1 = arith.constant 0 : i32
    return %c0_i32, %c0_i32_0 : i32, i32
  }
  func.func @transform_4(%arg0: i32, %arg1: i32) -> (i32, i32) {
    %c0_i32 = arith.constant 0 : i32
    %c0_i32_0 = arith.constant 0 : i32
    %c0_i32_1 = arith.constant 0 : i32
    return %c0_i32, %c0_i32_0 : i32, i32
  }
  func.func @transform_5(%arg0: i32, %arg1: i32) -> (i32, i32) {
    %c0_i32 = arith.constant 0 : i32
    %c0_i32_0 = arith.constant 0 : i32
    return %arg0, %c0_i32 : i32, i32
  }
}

module attributes {stable_mosaic.version = 11 : i64} {
  func.func @_res_classifier_kernel(%arg0: i32, %arg1: i32, %arg2: memref<8x128xf32, #tpu.memory_space<vmem>>, %arg3: memref<128x1024xf32, #tpu.memory_space<vmem>>, %arg4: memref<1x1024xf32, #tpu.memory_space<vmem>>, %arg5: memref<1024x128xf32, #tpu.memory_space<vmem>>, %arg6: memref<1x128xf32, #tpu.memory_space<vmem>>, %arg7: memref<8x128xf32, #tpu.memory_space<vmem>>, %arg8: memref<8x1024xf32, #tpu.memory_space<vmem>>) attributes {dimension_semantics = [#tpu.dimension_semantics<arbitrary>, #tpu.dimension_semantics<arbitrary>], iteration_bounds = array<i64: 1, 1>, scalar_prefetch = 0 : i64, scratch_operands = 1 : i64, tpu.core_type = #tpu.core_type<tc>, window_params = [{transform_indices = @transform_0, window_bounds = array<i64: 8, 128>}, {transform_indices = @transform_1, window_bounds = array<i64: 128, 1024>}, {pipeline_mode = #tpu.pipeline_mode<synchronous>, transform_indices = @transform_2, window_bounds = array<i64: 1, 1024>}, {pipeline_mode = #tpu.pipeline_mode<synchronous>, transform_indices = @transform_3, window_bounds = array<i64: 1024, 128>}, {pipeline_mode = #tpu.pipeline_mode<synchronous>, transform_indices = @transform_4, window_bounds = array<i64: 1, 128>}, {transform_indices = @transform_5, window_bounds = array<i64: 8, 128>}]} {
    %c0_i32 = arith.constant 0 : i32
    %0 = arith.cmpi eq, %arg1, %c0_i32 : i32
    %1 = arith.extui %0 : i1 to i32
    %c0_i32_0 = arith.constant 0 : i32
    %2 = arith.cmpi ne, %1, %c0_i32_0 : i32
    scf.if %2 {
      %cst_10 = arith.constant 0.000000e+00 : f32
      %12 = vector.broadcast %cst_10 : f32 to vector<8x1024xf32>
      %c0_11 = arith.constant 0 : index
      %c0_12 = arith.constant 0 : index
      %13 = vector.load %arg8[%c0_11, %c0_12] : memref<8x1024xf32, #tpu.memory_space<vmem>>, vector<8x1024xf32>
      tpu.vector_store %arg8[%c0_11, %c0_12], %12 {strides = array<i32>} : memref<8x1024xf32, #tpu.memory_space<vmem>>, vector<8x1024xf32>,
    } else {
    }
    %c0 = arith.constant 0 : index
    %c0_1 = arith.constant 0 : index
    %3 = vector.load %arg8[%c0, %c0_1] : memref<8x1024xf32, #tpu.memory_space<vmem>>, vector<8x1024xf32>
    %c0_2 = arith.constant 0 : index
    %c0_3 = arith.constant 0 : index
    %4 = vector.load %arg2[%c0_2, %c0_3] : memref<8x128xf32, #tpu.memory_space<vmem>>, vector<8x128xf32>
    %c0_4 = arith.constant 0 : index
    %c0_5 = arith.constant 0 : index
    %5 = vector.load %arg3[%c0_4, %c0_5] : memref<128x1024xf32, #tpu.memory_space<vmem>>, vector<128x1024xf32>
    %cst = arith.constant dense<0.000000e+00> : vector<8x1024xf32>
    %6 = tpu.matmul %4, %5, %cst {dimension_numbers = #tpu.dot_dimension_numbers<[1], [0], [0], [1], [0, 0, 1, 1], [], []>} : vector<8x128xf32>, vector<128x1024xf32>, vector<8x1024xf32> -> vector<8x1024xf32>
    %7 = arith.addf %3, %6 : vector<8x1024xf32>
    %c0_6 = arith.constant 0 : index
    %c0_7 = arith.constant 0 : index
    %8 = vector.load %arg8[%c0_6, %c0_7] : memref<8x1024xf32, #tpu.memory_space<vmem>>, vector<8x1024xf32>
    tpu.vector_store %arg8[%c0_6, %c0_7], %7 {strides = array<i32>} : memref<8x1024xf32, #tpu.memory_space<vmem>>, vector<8x1024xf32>,
    %c0_i32_8 = arith.constant 0 : i32
    %9 = arith.cmpi eq, %arg1, %c0_i32_8 : i32
    %10 = arith.extui %9 : i1 to i32
    %c0_i32_9 = arith.constant 0 : i32
    %11 = arith.cmpi ne, %10, %c0_i32_9 : i32
    scf.if %11 {
      %c0_10 = arith.constant 0 : index
      %c0_11 = arith.constant 0 : index
      %12 = vector.load %arg8[%c0_10, %c0_11] : memref<8x1024xf32, #tpu.memory_space<vmem>>, vector<8x1024xf32>
      %c0_12 = arith.constant 0 : index
      %c0_13 = arith.constant 0 : index
      %13 = vector.load %arg4[%c0_12, %c0_13] : memref<1x1024xf32, #tpu.memory_space<vmem>>, vector<1x1024xf32>
      %14 = vector.broadcast %13 : vector<1x1024xf32> to vector<8x1024xf32>
      %15 = arith.addf %12, %14 : vector<8x1024xf32>
      %cst_14 = arith.constant 0.000000e+00 : f32
      %16 = vector.broadcast %cst_14 : f32 to vector<8x1024xf32>
      %17 = arith.maximumf %15, %16 : vector<8x1024xf32>
      %c0_15 = arith.constant 0 : index
      %c0_16 = arith.constant 0 : index
      %18 = vector.load %arg5[%c0_15, %c0_16] : memref<1024x128xf32, #tpu.memory_space<vmem>>, vector<1024x128xf32>
      %cst_17 = arith.constant dense<0.000000e+00> : vector<8x128xf32>
      %19 = tpu.matmul %17, %18, %cst_17 {dimension_numbers = #tpu.dot_dimension_numbers<[1], [0], [0], [1], [0, 0, 1, 1], [], []>} : vector<8x1024xf32>, vector<1024x128xf32>, vector<8x128xf32> -> vector<8x128xf32>
      %c0_18 = arith.constant 0 : index
      %c0_19 = arith.constant 0 : index
      %20 = vector.load %arg6[%c0_18, %c0_19] : memref<1x128xf32, #tpu.memory_space<vmem>>, vector<1x128xf32>
      %21 = vector.broadcast %20 : vector<1x128xf32> to vector<8x128xf32>
      %22 = arith.addf %19, %21 : vector<8x128xf32>
      %c0_20 = arith.constant 0 : index
      %c0_21 = arith.constant 0 : index
      %23 = vector.load %arg7[%c0_20, %c0_21] : memref<8x128xf32, #tpu.memory_space<vmem>>, vector<8x128xf32>
      tpu.vector_store %arg7[%c0_20, %c0_21], %22 {strides = array<i32>} : memref<8x128xf32, #tpu.memory_space<vmem>>, vector<8x128xf32>,
    } else {
    }
    return
  }
  func.func @transform_0(%arg0: i32, %arg1: i32) -> (i32, i32) {
    %c0_i32 = arith.constant 0 : i32
    return %arg0, %arg1 : i32, i32
  }
  func.func @transform_1(%arg0: i32, %arg1: i32) -> (i32, i32) {
    %c0_i32 = arith.constant 0 : i32
    %c0_i32_0 = arith.constant 0 : i32
    return %arg1, %c0_i32 : i32, i32
  }
  func.func @transform_2(%arg0: i32, %arg1: i32) -> (i32, i32) {
    %c0_i32 = arith.constant 0 : i32
    %c0_i32_0 = arith.constant 0 : i32
    %c0_i32_1 = arith.constant 0 : i32
    return %c0_i32, %c0_i32_0 : i32, i32
  }
  func.func @transform_3(%arg0: i32, %arg1: i32) -> (i32, i32) {
    %c0_i32 = arith.constant 0 : i32
    %c0_i32_0 = arith.constant 0 : i32
    %c0_i32_1 = arith.constant 0 : i32
    return %c0_i32, %c0_i32_0 : i32, i32
  }
  func.func @transform_4(%arg0: i32, %arg1: i32) -> (i32, i32) {
    %c0_i32 = arith.constant 0 : i32
    %c0_i32_0 = arith.constant 0 : i32
    %c0_i32_1 = arith.constant 0 : i32
    return %c0_i32, %c0_i32_0 : i32, i32
  }
  func.func @transform_5(%arg0: i32, %arg1: i32) -> (i32, i32) {
    %c0_i32 = arith.constant 0 : i32
    %c0_i32_0 = arith.constant 0 : i32
    return %arg0, %c0_i32 : i32, i32
  }
}

</mosaic_0001>

<llo_original>
// kernel: tpu_custom_call.1
$region0: #{tpu_custom_call.1}
  #allocation0 [shape = 'u32[]', space=smem, size = 0x4, offset = 0x4, fixed_abs, tag = 'smem constant byte address 0x4 - core index']
  #allocation1 [shape = 'u32[72,128]{1,0:T(1,128)}', space=vmem, size = 0x9000, scoped, tag = 'internal scratch']
  #allocation2 [shape = 'f32[8,1024]{1,0:T(8,128)}', space=vmem, size = 0x8000, scoped, tag = 'scratch operand']
  %s0 = inlined_call_operand.hbm [shape: f32[8,128], index: 0, kind: input, shape index: {}]
  %s1 = inlined_call_operand.hbm [shape: f32[128,1024], index: 1, kind: input, shape index: {}]
  %s2 = inlined_call_operand.hbm [shape: f32[1,1024], index: 2, kind: input, shape index: {}]
  %s3 = inlined_call_operand.hbm [shape: f32[1024,128], index: 3, kind: input, shape index: {}]
  %s4 = inlined_call_operand.vmem [shape: f32[1,128], index: 4, kind: input, shape index: {}]
  %s5 = inlined_call_operand.hbm [shape: f32[8,128], index: 5, kind: output, shape index: {}]
  %s6 = sld [smem:[#allocation0]]
  $region54: #{tpu_custom_call.1} parent=0
    _
  %s8 = ssub.s32 1, %s6
  %s9 = scalar_select 0, %s8, %s6
  $region1: #{tpu_custom_call.1} parent=0
    #allocation3 [shape = 'u8[4096]{0}', space=vmem, size = 0x1000, scoped, tag = 'input window, operand 0, single buffered']
    #allocation4 [shape = 's32[1]{0}', space=sflag, size = 0x4, scoped, tag = 'scoped memory for tpu_custom_call.1']
    #allocation5 [shape = 's32[1]{0}', space=sflag, size = 0x4, scoped, tag = 'scoped memory for tpu_custom_call.1']
    #allocation6 [shape = 'u8[524288]{0}', space=vmem, size = 0x80000, scoped, tag = 'input window, operand 1, single buffered']
    #allocation7 [shape = 's32[1]{0}', space=sflag, size = 0x4, scoped, tag = 'scoped memory for tpu_custom_call.1']
    #allocation8 [shape = 'u8[4096]{0}', space=vmem, size = 0x1000, scoped, tag = 'input window, operand 2, single buffered']
    #allocation9 [shape = 'u8[524288]{0}', space=vmem, size = 0x80000, scoped, tag = 'input window, operand 3, single buffered']
    #allocation10 [shape = 's32[1]{0}', space=sflag, size = 0x4, scoped, tag = 'scoped memory for tpu_custom_call.1']
    #allocation11 [shape = 'u8[4096]{0}', space=vmem, size = 0x1000, scoped, tag = 'output window, operand 0, single buffered']
    %10 = vsyncpa [#allocation4], 0
    %11 = vsyncpa [#allocation7], 0
    %12 = vsyncpa [#allocation10], 0
    %13 = vsyncpa [#allocation5], 0
    // Predicated region
    $region2: #{tpu_custom_call.1} parent=1 // pred_check
      _
    $region3: #{tpu_custom_call.1} parent=1 // pred_check_branch
      %15 = sbr.rel (0) target = $region5
    $region4: #{tpu_custom_call.1} parent=1 // pred_region
      %17 = vsyncadd [#allocation4], 0
      %s19 = sshll.u32 %s0, 4
      %s20 = int_to_ptr.hbm [resolvable:$true] %s19
      %s21 = sshll.u32 [#allocation3], 4
      %s22 = int_to_ptr.vmem [resolvable:$true] %s21
      %24 = dma.hbm_to_vmem [thread:$0]  %s20, 128, %s22, [#allocation4]
    $region5: #{tpu_custom_call.1} parent=1 // pred_fallthru
      _
    // Predicated region
    $region6: #{tpu_custom_call.1} parent=1 // pred_check
      _
    $region7: #{tpu_custom_call.1} parent=1 // pred_check_branch
      %26 = sbr.rel (0) target = $region9
    $region8: #{tpu_custom_call.1} parent=1 // pred_region
      %28 = vsyncadd [#allocation7], 0
      %s29 = sshll.u32 %s1, 4
      %s30 = int_to_ptr.hbm [resolvable:$true] %s29
      %s31 = sshll.u32 [#allocation6], 4
      %s32 = int_to_ptr.vmem [resolvable:$true] %s31
      %37 = dma.hbm_to_vmem [thread:$0]  %s30, 16384, %s32, [#allocation7], 1024, 1024, 64
    $region9: #{tpu_custom_call.1} parent=1 // pred_fallthru
      _
    // Predicated region
    $region10: #{tpu_custom_call.1} parent=1 // pred_check
      _
    $region11: #{tpu_custom_call.1} parent=1 // pred_check_branch
      %39 = sbr.rel (0) target = $region13
    $region12: #{tpu_custom_call.1} parent=1 // pred_region
      %41 = vsyncadd [#allocation7], 0
      %s43 = sshll.u32 %s2, 4
      %s44 = int_to_ptr.hbm [resolvable:$true] %s43
      %s45 = sshll.u32 [#allocation8], 4
      %s46 = int_to_ptr.vmem [resolvable:$true] %s45
      %48 = dma.hbm_to_vmem [thread:$0]  %s44, 128, %s46, [#allocation7]
    $region13: #{tpu_custom_call.1} parent=1 // pred_fallthru
      _
    // Predicated region
    $region14: #{tpu_custom_call.1} parent=1 // pred_check
      _
    $region15: #{tpu_custom_call.1} parent=1 // pred_check_branch
      %50 = sbr.rel (0) target = $region17
    $region16: #{tpu_custom_call.1} parent=1 // pred_region
      %52 = vsyncadd [#allocation10], 0
      %s53 = sshll.u32 %s3, 4
      %s54 = int_to_ptr.hbm [resolvable:$true] %s53
      %s55 = sshll.u32 [#allocation9], 4
      %s56 = int_to_ptr.vmem [resolvable:$true] %s55
      %61 = dma.hbm_to_vmem [thread:$0]  %s54, 16384, %s56, [#allocation10], 128, 128, 8
    $region17: #{tpu_custom_call.1} parent=1 // pred_fallthru
      _
    // Predicated region
    $region18: #{tpu_custom_call.1} parent=1 // pred_check
      _
    $region19: #{tpu_custom_call.1} parent=1 // pred_check_branch
      %63 = sbr.rel (0) target = $region21
    $region20: #{tpu_custom_call.1} parent=1 // pred_region
      _
    $region21: #{tpu_custom_call.1} parent=1 // pred_fallthru
      _
    // Predicated region
    $region22: #{tpu_custom_call.1} parent=1 // pred_check
      _
    $region23: #{tpu_custom_call.1} parent=1 // pred_check_branch
      %65 = sbr.rel (0) target = $region25
    $region24: #{tpu_custom_call.1} parent=1 // pred_region
      %67 = dma.done [#allocation4], 128
    $region25: #{tpu_custom_call.1} parent=1 // pred_fallthru
      _
    // Predicated region
    $region26: #{tpu_custom_call.1} parent=1 // pred_check
      _
    $region27: #{tpu_custom_call.1} parent=1 // pred_check_branch
      %69 = sbr.rel (0) target = $region29
    $region28: #{tpu_custom_call.1} parent=1 // pred_region
      %71 = dma.done [#allocation7], 16384
    $region29: #{tpu_custom_call.1} parent=1 // pred_fallthru
      _
    // Predicated region
    $region30: #{tpu_custom_call.1} parent=1 // pred_check
      _
    $region31: #{tpu_custom_call.1} parent=1 // pred_check_branch
      %73 = sbr.rel (0) target = $region33
    $region32: #{tpu_custom_call.1} parent=1 // pred_region
      %75 = dma.done [#allocation7], 128
    $region33: #{tpu_custom_call.1} parent=1 // pred_fallthru
      _
    // Predicated region
    $region34: #{tpu_custom_call.1} parent=1 // pred_check
      _
    $region35: #{tpu_custom_call.1} parent=1 // pred_check_branch
      %77 = sbr.rel (0) target = $region37
    $region36: #{tpu_custom_call.1} parent=1 // pred_region
      %79 = dma.done [#allocation10], 16384
    $region37: #{tpu_custom_call.1} parent=1 // pred_fallthru
      _
    %p80 = scmp.eq.s32.totalorder 0, 0
    // Predicated region
    $region38: #{tpu_custom_call.1} parent=1 // pred_check
      %p81 = pneg %p80
    $region39: #{tpu_custom_call.1} parent=1 // pred_check_branch
      %83 = sbr.rel (%p81) target = $region41
    $region40: #{tpu_custom_call.1} parent=1 // pred_region
      %84 = vst [vmem:[#allocation2] sm:$0xff] 0.0
      %85 = vst [vmem:[#allocation2 + $0x8] sm:$0xff] 0.0
      %86 = vst [vmem:[#allocation2 + $0x10] sm:$0xff] 0.0
      %87 = vst [vmem:[#allocation2 + $0x18] sm:$0xff] 0.0
      %88 = vst [vmem:[#allocation2 + $0x20] sm:$0xff] 0.0
      %89 = vst [vmem:[#allocation2 + $0x28] sm:$0xff] 0.0
      %90 = vst [vmem:[#allocation2 + $0x30] sm:$0xff] 0.0
      %91 = vst [vmem:[#allocation2 + $0x38] sm:$0xff] 0.0
    $region41: #{tpu_custom_call.1} parent=1 // pred_fallthru
      _
    %v92 = vld [vmem:[#allocation2] sm:$0xff]
    %v93 = vld [vmem:[#allocation2 + $0x8] sm:$0xff]
    %v94 = vld [vmem:[#allocation2 + $0x10] sm:$0xff]
    %v95 = vld [vmem:[#allocation2 + $0x18] sm:$0xff]
    %v96 = vld [vmem:[#allocation2 + $0x20] sm:$0xff]
    %v97 = vld [vmem:[#allocation2 + $0x28] sm:$0xff]
    %v98 = vld [vmem:[#allocation2 + $0x30] sm:$0xff]
    %v99 = vld [vmem:[#allocation2 + $0x38] sm:$0xff]
    %v100 = vld [vmem:[#allocation3] sm:$0xff]
    %v101 = vld [vmem:[#allocation6] sm:$0xff]
    %v102 = vld [vmem:[#allocation6 + $0x8] sm:$0xff]
    %v103 = vld [vmem:[#allocation6 + $0x10] sm:$0xff]
    %v104 = vld [vmem:[#allocation6 + $0x18] sm:$0xff]
    %v105 = vld [vmem:[#allocation6 + $0x20] sm:$0xff]
    %v106 = vld [vmem:[#allocation6 + $0x28] sm:$0xff]
    %v107 = vld [vmem:[#allocation6 + $0x30] sm:$0xff]
    %v108 = vld [vmem:[#allocation6 + $0x38] sm:$0xff]
    %v109 = vld [vmem:[#allocation6 + $0x40] sm:$0xff]
    %v110 = vld [vmem:[#allocation6 + $0x48] sm:$0xff]
    %v111 = vld [vmem:[#allocation6 + $0x50] sm:$0xff]
    %v112 = vld [vmem:[#allocation6 + $0x58] sm:$0xff]
    %v113 = vld [vmem:[#allocation6 + $0x60] sm:$0xff]
    %v114 = vld [vmem:[#allocation6 + $0x68] sm:$0xff]
    %v115 = vld [vmem:[#allocation6 + $0x70] sm:$0xff]
    %v116 = vld [vmem:[#allocation6 + $0x78] sm:$0xff]
    %v117 = vld [vmem:[#allocation6 + $0x80] sm:$0xff]
    %v118 = vld [vmem:[#allocation6 + $0x88] sm:$0xff]
    %v119 = vld [vmem:[#allocation6 + $0x90] sm:$0xff]
    %v120 = vld [vmem:[#allocation6 + $0x98] sm:$0xff]
    %v121 = vld [vmem:[#allocation6 + $0xa0] sm:$0xff]
    %v122 = vld [vmem:[#allocation6 + $0xa8] sm:$0xff]
    %v123 = vld [vmem:[#allocation6 + $0xb0] sm:$0xff]
    %v124 = vld [vmem:[#allocation6 + $0xb8] sm:$0xff]
    %v125 = vld [vmem:[#allocation6 + $0xc0] sm:$0xff]
    %v126 = vld [vmem:[#allocation6 + $0xc8] sm:$0xff]
    %v127 = vld [vmem:[#allocation6 + $0xd0] sm:$0xff]
    %v128 = vld [vmem:[#allocation6 + $0xd8] sm:$0xff]
    %v129 = vld [vmem:[#allocation6 + $0xe0] sm:$0xff]
    %v130 = vld [vmem:[#allocation6 + $0xe8] sm:$0xff]
    %v131 = vld [vmem:[#allocation6 + $0xf0] sm:$0xff]
    %v132 = vld [vmem:[#allocation6 + $0xf8] sm:$0xff]
    %v133 = vld [vmem:[#allocation6 + $0x100] sm:$0xff]
    %v134 = vld [vmem:[#allocation6 + $0x108] sm:$0xff]
    %v135 = vld [vmem:[#allocation6 + $0x110] sm:$0xff]
    %v136 = vld [vmem:[#allocation6 + $0x118] sm:$0xff]
    %v137 = vld [vmem:[#allocation6 + $0x120] sm:$0xff]
    %v138 = vld [vmem:[#allocation6 + $0x128] sm:$0xff]
    %v139 = vld [vmem:[#allocation6 + $0x130] sm:$0xff]
    %v140 = vld [vmem:[#allocation6 + $0x138] sm:$0xff]
    %v141 = vld [vmem:[#allocation6 + $0x140] sm:$0xff]
    %v142 = vld [vmem:[#allocation6 + $0x148] sm:$0xff]
    %v143 = vld [vmem:[#allocation6 + $0x150] sm:$0xff]
    %v144 = vld [vmem:[#allocation6 + $0x158] sm:$0xff]
    %v145 = vld [vmem:[#allocation6 + $0x160] sm:$0xff]
    %v146 = vld [vmem:[#allocation6 + $0x168] sm:$0xff]
    %v147 = vld [vmem:[#allocation6 + $0x170] sm:$0xff]
    %v148 = vld [vmem:[#allocation6 + $0x178] sm:$0xff]
    %v149 = vld [vmem:[#allocation6 + $0x180] sm:$0xff]
    %v150 = vld [vmem:[#allocation6 + $0x188] sm:$0xff]
    %v151 = vld [vmem:[#allocation6 + $0x190] sm:$0xff]
    %v152 = vld [vmem:[#allocation6 + $0x198] sm:$0xff]
    %v153 = vld [vmem:[#allocation6 + $0x1a0] sm:$0xff]
    %v154 = vld [vmem:[#allocation6 + $0x1a8] sm:$0xff]
    %v155 = vld [vmem:[#allocation6 + $0x1b0] sm:$0xff]
    %v156 = vld [vmem:[#allocation6 + $0x1b8] sm:$0xff]
    %v157 = vld [vmem:[#allocation6 + $0x1c0] sm:$0xff]
    %v158 = vld [vmem:[#allocation6 + $0x1c8] sm:$0xff]
    %v159 = vld [vmem:[#allocation6 + $0x1d0] sm:$0xff]
    %v160 = vld [vmem:[#allocation6 + $0x1d8] sm:$0xff]
    %v161 = vld [vmem:[#allocation6 + $0x1e0] sm:$0xff]
    %v162 = vld [vmem:[#allocation6 + $0x1e8] sm:$0xff]
    %v163 = vld [vmem:[#allocation6 + $0x1f0] sm:$0xff]
    %v164 = vld [vmem:[#allocation6 + $0x1f8] sm:$0xff]
    %v165 = vld [vmem:[#allocation6 + $0x200] sm:$0xff]
    %v166 = vld [vmem:[#allocation6 + $0x208] sm:$0xff]
    %v167 = vld [vmem:[#allocation6 + $0x210] sm:$0xff]
    %v168 = vld [vmem:[#allocation6 + $0x218] sm:$0xff]
    %v169 = vld [vmem:[#allocation6 + $0x220] sm:$0xff]
    %v170 = vld [vmem:[#allocation6 + $0x228] sm:$0xff]
    %v171 = vld [vmem:[#allocation6 + $0x230] sm:$0xff]
    %v172 = vld [vmem:[#allocation6 + $0x238] sm:$0xff]
    %v173 = vld [vmem:[#allocation6 + $0x240] sm:$0xff]
    %v174 = vld [vmem:[#allocation6 + $0x248] sm:$0xff]
    %v175 = vld [vmem:[#allocation6 + $0x250] sm:$0xff]
    %v176 = vld [vmem:[#allocation6 + $0x258] sm:$0xff]
    %v177 = vld [vmem:[#allocation6 + $0x260] sm:$0xff]
    %v178 = vld [vmem:[#allocation6 + $0x268] sm:$0xff]
    %v179 = vld [vmem:[#allocation6 + $0x270] sm:$0xff]
    %v180 = vld [vmem:[#allocation6 + $0x278] sm:$0xff]
    %v181 = vld [vmem:[#allocation6 + $0x280] sm:$0xff]
    %v182 = vld [vmem:[#allocation6 + $0x288] sm:$0xff]
    %v183 = vld [vmem:[#allocation6 + $0x290] sm:$0xff]
    %v184 = vld [vmem:[#allocation6 + $0x298] sm:$0xff]
    %v185 = vld [vmem:[#allocation6 + $0x2a0] sm:$0xff]
    %v186 = vld [vmem:[#allocation6 + $0x2a8] sm:$0xff]
    %v187 = vld [vmem:[#allocation6 + $0x2b0] sm:$0xff]
    %v188 = vld [vmem:[#allocation6 + $0x2b8] sm:$0xff]
    %v189 = vld [vmem:[#allocation6 + $0x2c0] sm:$0xff]
    %v190 = vld [vmem:[#allocation6 + $0x2c8] sm:$0xff]
    %v191 = vld [vmem:[#allocation6 + $0x2d0] sm:$0xff]
    %v192 = vld [vmem:[#allocation6 + $0x2d8] sm:$0xff]
    %v193 = vld [vmem:[#allocation6 + $0x2e0] sm:$0xff]
    %v194 = vld [vmem:[#allocation6 + $0x2e8] sm:$0xff]
    %v195 = vld [vmem:[#allocation6 + $0x2f0] sm:$0xff]
    %v196 = vld [vmem:[#allocation6 + $0x2f8] sm:$0xff]
    %v197 = vld [vmem:[#allocation6 + $0x300] sm:$0xff]
    %v198 = vld [vmem:[#allocation6 + $0x308] sm:$0xff]
    %v199 = vld [vmem:[#allocation6 + $0x310] sm:$0xff]
    %v200 = vld [vmem:[#allocation6 + $0x318] sm:$0xff]
    %v201 = vld [vmem:[#allocation6 + $0x320] sm:$0xff]
    %v202 = vld [vmem:[#allocation6 + $0x328] sm:$0xff]
    %v203 = vld [vmem:[#allocation6 + $0x330] sm:$0xff]
    %v204 = vld [vmem:[#allocation6 + $0x338] sm:$0xff]
    %v205 = vld [vmem:[#allocation6 + $0x340] sm:$0xff]
    %v206 = vld [vmem:[#allocation6 + $0x348] sm:$0xff]
    %v207 = vld [vmem:[#allocation6 + $0x350] sm:$0xff]
    %v208 = vld [vmem:[#allocation6 + $0x358] sm:$0xff]
    %v209 = vld [vmem:[#allocation6 + $0x360] sm:$0xff]
    %v210 = vld [vmem:[#allocation6 + $0x368] sm:$0xff]
    %v211 = vld [vmem:[#allocation6 + $0x370] sm:$0xff]
    %v212 = vld [vmem:[#allocation6 + $0x378] sm:$0xff]
    %v213 = vld [vmem:[#allocation6 + $0x380] sm:$0xff]
    %v214 = vld [vmem:[#allocation6 + $0x388] sm:$0xff]
    %v215 = vld [vmem:[#allocation6 + $0x390] sm:$0xff]
    %v216 = vld [vmem:[#allocation6 + $0x398] sm:$0xff]
    %v217 = vld [vmem:[#allocation6 + $0x3a0] sm:$0xff]
    %v218 = vld [vmem:[#allocation6 + $0x3a8] sm:$0xff]
    %v219 = vld [vmem:[#allocation6 + $0x3b0] sm:$0xff]
    %v220 = vld [vmem:[#allocation6 + $0x3b8] sm:$0xff]
    %v221 = vld [vmem:[#allocation6 + $0x3c0] sm:$0xff]
    %v222 = vld [vmem:[#allocation6 + $0x3c8] sm:$0xff]
    %v223 = vld [vmem:[#allocation6 + $0x3d0] sm:$0xff]
    %v224 = vld [vmem:[#allocation6 + $0x3d8] sm:$0xff]
    %v225 = vld [vmem:[#allocation6 + $0x3e0] sm:$0xff]
    %v226 = vld [vmem:[#allocation6 + $0x3e8] sm:$0xff]
    %v227 = vld [vmem:[#allocation6 + $0x3f0] sm:$0xff]
    %v228 = vld [vmem:[#allocation6 + $0x3f8] sm:$0xff]
    %229 = vmatpush.msra.mxu0 %v221
    %230 = vmatpush.msra.mxu0 %v213
    %231 = vmatpush.msra.mxu0 %v205
    %232 = vmatpush.msra.mxu0 %v197
    %233 = vmatpush.msra.mxu0 %v189
    %234 = vmatpush.msra.mxu0 %v181
    %235 = vmatpush.msra.mxu0 %v173
    %236 = vmatpush.msra.mxu0 %v165
    %237 = vmatpush.msra.mxu0 %v157
    %238 = vmatpush.msra.mxu0 %v149
    %239 = vmatpush.msra.mxu0 %v141
    %240 = vmatpush.msra.mxu0 %v133
    %241 = vmatpush.msra.mxu0 %v125
    %242 = vmatpush.msra.mxu0 %v117
    %243 = vmatpush.msra.mxu0 %v109
    %244 = vmatpush.msra.mxu0 %v101
    %245 = vmatmul.f32.gmra.mxu0 %v100
    %v246 = vpop.f32.mrf.mxu0
    %v247 = vadd.f32 0.0, %v246
    %248 = vdwg.mxu0
    %249 = vmatpush.msra.mxu0 %v222
    %250 = vmatpush.msra.mxu0 %v214
    %251 = vmatpush.msra.mxu0 %v206
    %252 = vmatpush.msra.mxu0 %v198
    %253 = vmatpush.msra.mxu0 %v190
    %254 = vmatpush.msra.mxu0 %v182
    %255 = vmatpush.msra.mxu0 %v174
    %256 = vmatpush.msra.mxu0 %v166
    %257 = vmatpush.msra.mxu0 %v158
    %258 = vmatpush.msra.mxu0 %v150
    %259 = vmatpush.msra.mxu0 %v142
    %260 = vmatpush.msra.mxu0 %v134
    %261 = vmatpush.msra.mxu0 %v126
    %262 = vmatpush.msra.mxu0 %v118
    %263 = vmatpush.msra.mxu0 %v110
    %264 = vmatpush.msra.mxu0 %v102
    %265 = vmatmul.f32.gmra.mxu0 %v100
    %v266 = vpop.f32.mrf.mxu0
    %v267 = vadd.f32 0.0, %v266
    %268 = vdwg.mxu0
    %269 = vmatpush.msra.mxu0 %v223
    %270 = vmatpush.msra.mxu0 %v215
    %271 = vmatpush.msra.mxu0 %v207
    %272 = vmatpush.msra.mxu0 %v199
    %273 = vmatpush.msra.mxu0 %v191
    %274 = vmatpush.msra.mxu0 %v183
    %275 = vmatpush.msra.mxu0 %v175
    %276 = vmatpush.msra.mxu0 %v167
    %277 = vmatpush.msra.mxu0 %v159
    %278 = vmatpush.msra.mxu0 %v151
    %279 = vmatpush.msra.mxu0 %v143
    %280 = vmatpush.msra.mxu0 %v135
    %281 = vmatpush.msra.mxu0 %v127
    %282 = vmatpush.msra.mxu0 %v119
    %283 = vmatpush.msra.mxu0 %v111
    %284 = vmatpush.msra.mxu0 %v103
    %285 = vmatmul.f32.gmra.mxu0 %v100
    %v286 = vpop.f32.mrf.mxu0
    %v287 = vadd.f32 0.0, %v286
    %288 = vdwg.mxu0
    %289 = vmatpush.msra.mxu0 %v224
    %290 = vmatpush.msra.mxu0 %v216
    %291 = vmatpush.msra.mxu0 %v208
    %292 = vmatpush.msra.mxu0 %v200
    %293 = vmatpush.msra.mxu0 %v192
    %294 = vmatpush.msra.mxu0 %v184
    %295 = vmatpush.msra.mxu0 %v176
    %296 = vmatpush.msra.mxu0 %v168
    %297 = vmatpush.msra.mxu0 %v160
    %298 = vmatpush.msra.mxu0 %v152
    %299 = vmatpush.msra.mxu0 %v144
    %300 = vmatpush.msra.mxu0 %v136
    %301 = vmatpush.msra.mxu0 %v128
    %302 = vmatpush.msra.mxu0 %v120
    %303 = vmatpush.msra.mxu0 %v112
    %304 = vmatpush.msra.mxu0 %v104
    %305 = vmatmul.f32.gmra.mxu0 %v100
    %v306 = vpop.f32.mrf.mxu0
    %v307 = vadd.f32 0.0, %v306
    %308 = vdwg.mxu0
    %309 = vmatpush.msra.mxu0 %v225
    %310 = vmatpush.msra.mxu0 %v217
    %311 = vmatpush.msra.mxu0 %v209
    %312 = vmatpush.msra.mxu0 %v201
    %313 = vmatpush.msra.mxu0 %v193
    %314 = vmatpush.msra.mxu0 %v185
    %315 = vmatpush.msra.mxu0 %v177
    %316 = vmatpush.msra.mxu0 %v169
    %317 = vmatpush.msra.mxu0 %v161
    %318 = vmatpush.msra.mxu0 %v153
    %319 = vmatpush.msra.mxu0 %v145
    %320 = vmatpush.msra.mxu0 %v137
    %321 = vmatpush.msra.mxu0 %v129
    %322 = vmatpush.msra.mxu0 %v121
    %323 = vmatpush.msra.mxu0 %v113
    %324 = vmatpush.msra.mxu0 %v105
    %325 = vmatmul.f32.gmra.mxu0 %v100
    %v326 = vpop.f32.mrf.mxu0
    %v327 = vadd.f32 0.0, %v326
    %328 = vdwg.mxu0
    %329 = vmatpush.msra.mxu0 %v226
    %330 = vmatpush.msra.mxu0 %v218
    %331 = vmatpush.msra.mxu0 %v210
    %332 = vmatpush.msra.mxu0 %v202
    %333 = vmatpush.msra.mxu0 %v194
    %334 = vmatpush.msra.mxu0 %v186
    %335 = vmatpush.msra.mxu0 %v178
    %336 = vmatpush.msra.mxu0 %v170
    %337 = vmatpush.msra.mxu0 %v162
    %338 = vmatpush.msra.mxu0 %v154
    %339 = vmatpush.msra.mxu0 %v146
    %340 = vmatpush.msra.mxu0 %v138
    %341 = vmatpush.msra.mxu0 %v130
    %342 = vmatpush.msra.mxu0 %v122
    %343 = vmatpush.msra.mxu0 %v114
    %344 = vmatpush.msra.mxu0 %v106
    %345 = vmatmul.f32.gmra.mxu0 %v100
    %v346 = vpop.f32.mrf.mxu0
    %v347 = vadd.f32 0.0, %v346
    %348 = vdwg.mxu0
    %349 = vmatpush.msra.mxu0 %v227
    %350 = vmatpush.msra.mxu0 %v219
    %351 = vmatpush.msra.mxu0 %v211
    %352 = vmatpush.msra.mxu0 %v203
    %353 = vmatpush.msra.mxu0 %v195
    %354 = vmatpush.msra.mxu0 %v187
    %355 = vmatpush.msra.mxu0 %v179
    %356 = vmatpush.msra.mxu0 %v171
    %357 = vmatpush.msra.mxu0 %v163
    %358 = vmatpush.msra.mxu0 %v155
    %359 = vmatpush.msra.mxu0 %v147
    %360 = vmatpush.msra.mxu0 %v139
    %361 = vmatpush.msra.mxu0 %v131
    %362 = vmatpush.msra.mxu0 %v123
    %363 = vmatpush.msra.mxu0 %v115
    %364 = vmatpush.msra.mxu0 %v107
    %365 = vmatmul.f32.gmra.mxu0 %v100
    %v366 = vpop.f32.mrf.mxu0
    %v367 = vadd.f32 0.0, %v366
    %368 = vdwg.mxu0
    %369 = vmatpush.msra.mxu0 %v228
    %370 = vmatpush.msra.mxu0 %v220
    %371 = vmatpush.msra.mxu0 %v212
    %372 = vmatpush.msra.mxu0 %v204
    %373 = vmatpush.msra.mxu0 %v196
    %374 = vmatpush.msra.mxu0 %v188
    %375 = vmatpush.msra.mxu0 %v180
    %376 = vmatpush.msra.mxu0 %v172
    %377 = vmatpush.msra.mxu0 %v164
    %378 = vmatpush.msra.mxu0 %v156
    %379 = vmatpush.msra.mxu0 %v148
    %380 = vmatpush.msra.mxu0 %v140
    %381 = vmatpush.msra.mxu0 %v132
    %382 = vmatpush.msra.mxu0 %v124
    %383 = vmatpush.msra.mxu0 %v116
    %384 = vmatpush.msra.mxu0 %v108
    %385 = vmatmul.f32.gmra.mxu0 %v100
    %v386 = vpop.f32.mrf.mxu0
    %v387 = vadd.f32 0.0, %v386
    %388 = vdwg.mxu0
    %v389 = vadd.f32 %v92, %v247
    %v390 = vadd.f32 %v93, %v267
    %v391 = vadd.f32 %v94, %v287
    %v392 = vadd.f32 %v95, %v307
    %v393 = vadd.f32 %v96, %v327
    %v394 = vadd.f32 %v97, %v347
    %v395 = vadd.f32 %v98, %v367
    %v396 = vadd.f32 %v99, %v387
    %397 = vst [vmem:[#allocation2] sm:$0xff] %v389
    %398 = vst [vmem:[#allocation2 + $0x8] sm:$0xff] %v390
    %399 = vst [vmem:[#allocation2 + $0x10] sm:$0xff] %v391
    %400 = vst [vmem:[#allocation2 + $0x18] sm:$0xff] %v392
    %401 = vst [vmem:[#allocation2 + $0x20] sm:$0xff] %v393
    %402 = vst [vmem:[#allocation2 + $0x28] sm:$0xff] %v394
    %403 = vst [vmem:[#allocation2 + $0x30] sm:$0xff] %v395
    %404 = vst [vmem:[#allocation2 + $0x38] sm:$0xff] %v396
    // Predicated region
    $region42: #{tpu_custom_call.1} parent=1 // pred_check
      %p405 = pneg %p80
    $region43: #{tpu_custom_call.1} parent=1 // pred_check_branch
      %407 = sbr.rel (%p405) target = $region45
    $region44: #{tpu_custom_call.1} parent=1 // pred_region
      %v408 = vld [vmem:[#allocation2] sm:$0xff]
      %v409 = vld [vmem:[#allocation2 + $0x8] sm:$0xff]
      %v410 = vld [vmem:[#allocation2 + $0x10] sm:$0xff]
      %v411 = vld [vmem:[#allocation2 + $0x18] sm:$0xff]
      %v412 = vld [vmem:[#allocation2 + $0x20] sm:$0xff]
      %v413 = vld [vmem:[#allocation2 + $0x28] sm:$0xff]
      %v414 = vld [vmem:[#allocation2 + $0x30] sm:$0xff]
      %v415 = vld [vmem:[#allocation2 + $0x38] sm:$0xff]
      %v416 = vld [vmem:[#allocation8] sm:$0xff]
      %v418 = vperm.slane %v416, 0
      %v419 = vperm.slane %v416, 1
      %v420 = vperm.slane %v416, 2
      %v421 = vperm.slane %v416, 3
      %v422 = vperm.slane %v416, 4
      %v423 = vperm.slane %v416, 5
      %v424 = vperm.slane %v416, 6
      %v425 = vperm.slane %v416, 7
      %v434 = vadd.f32 %v408, %v418
      %v435 = vadd.f32 %v409, %v419
      %v436 = vadd.f32 %v410, %v420
      %v437 = vadd.f32 %v411, %v421
      %v438 = vadd.f32 %v412, %v422
      %v439 = vadd.f32 %v413, %v423
      %v440 = vadd.f32 %v414, %v424
      %v441 = vadd.f32 %v415, %v425
      %v442 = vmax.f32 %v434, 0.0
      %v443 = vmax.f32 %v435, 0.0
      %v444 = vmax.f32 %v436, 0.0
      %v445 = vmax.f32 %v437, 0.0
      %v446 = vmax.f32 %v438, 0.0
      %v447 = vmax.f32 %v439, 0.0
      %v448 = vmax.f32 %v440, 0.0
      %v449 = vmax.f32 %v441, 0.0
      %v450 = vld [vmem:[#allocation9] sm:$0xff]
      %v451 = vld [vmem:[#allocation9 + $0x8] sm:$0xff]
      %v452 = vld [vmem:[#allocation9 + $0x10] sm:$0xff]
      %v453 = vld [vmem:[#allocation9 + $0x18] sm:$0xff]
      %v454 = vld [vmem:[#allocation9 + $0x20] sm:$0xff]
      %v455 = vld [vmem:[#allocation9 + $0x28] sm:$0xff]
      %v456 = vld [vmem:[#allocation9 + $0x30] sm:$0xff]
      %v457 = vld [vmem:[#allocation9 + $0x38] sm:$0xff]
      %v458 = vld [vmem:[#allocation9 + $0x40] sm:$0xff]
      %v459 = vld [vmem:[#allocation9 + $0x48] sm:$0xff]
      %v460 = vld [vmem:[#allocation9 + $0x50] sm:$0xff]
      %v461 = vld [vmem:[#allocation9 + $0x58] sm:$0xff]
      %v462 = vld [vmem:[#allocation9 + $0x60] sm:$0xff]
      %v463 = vld [vmem:[#allocation9 + $0x68] sm:$0xff]
      %v464 = vld [vmem:[#allocation9 + $0x70] sm:$0xff]
      %v465 = vld [vmem:[#allocation9 + $0x78] sm:$0xff]
      %v466 = vld [vmem:[#allocation9 + $0x80] sm:$0xff]
      %v467 = vld [vmem:[#allocation9 + $0x88] sm:$0xff]
      %v468 = vld [vmem:[#allocation9 + $0x90] sm:$0xff]
      %v469 = vld [vmem:[#allocation9 + $0x98] sm:$0xff]
      %v470 = vld [vmem:[#allocation9 + $0xa0] sm:$0xff]
      %v471 = vld [vmem:[#allocation9 + $0xa8] sm:$0xff]
      %v472 = vld [vmem:[#allocation9 + $0xb0] sm:$0xff]
      %v473 = vld [vmem:[#allocation9 + $0xb8] sm:$0xff]
      %v474 = vld [vmem:[#allocation9 + $0xc0] sm:$0xff]
      %v475 = vld [vmem:[#allocation9 + $0xc8] sm:$0xff]
      %v476 = vld [vmem:[#allocation9 + $0xd0] sm:$0xff]
      %v477 = vld [vmem:[#allocation9 + $0xd8] sm:$0xff]
      %v478 = vld [vmem:[#allocation9 + $0xe0] sm:$0xff]
      %v479 = vld [vmem:[#allocation9 + $0xe8] sm:$0xff]
      %v480 = vld [vmem:[#allocation9 + $0xf0] sm:$0xff]
      %v481 = vld [vmem:[#allocation9 + $0xf8] sm:$0xff]
      %v482 = vld [vmem:[#allocation9 + $0x100] sm:$0xff]
      %v483 = vld [vmem:[#allocation9 + $0x108] sm:$0xff]
      %v484 = vld [vmem:[#allocation9 + $0x110] sm:$0xff]
      %v485 = vld [vmem:[#allocation9 + $0x118] sm:$0xff]
      %v486 = vld [vmem:[#allocation9 + $0x120] sm:$0xff]
      %v487 = vld [vmem:[#allocation9 + $0x128] sm:$0xff]
      %v488 = vld [vmem:[#allocation9 + $0x130] sm:$0xff]
      %v489 = vld [vmem:[#allocation9 + $0x138] sm:$0xff]
      %v490 = vld [vmem:[#allocation9 + $0x140] sm:$0xff]
      %v491 = vld [vmem:[#allocation9 + $0x148] sm:$0xff]
      %v492 = vld [vmem:[#allocation9 + $0x150] sm:$0xff]
      %v493 = vld [vmem:[#allocation9 + $0x158] sm:$0xff]
      %v494 = vld [vmem:[#allocation9 + $0x160] sm:$0xff]
      %v495 = vld [vmem:[#allocation9 + $0x168] sm:$0xff]
      %v496 = vld [vmem:[#allocation9 + $0x170] sm:$0xff]
      %v497 = vld [vmem:[#allocation9 + $0x178] sm:$0xff]
      %v498 = vld [vmem:[#allocation9 + $0x180] sm:$0xff]
      %v499 = vld [vmem:[#allocation9 + $0x188] sm:$0xff]
      %v500 = vld [vmem:[#allocation9 + $0x190] sm:$0xff]
      %v501 = vld [vmem:[#allocation9 + $0x198] sm:$0xff]
      %v502 = vld [vmem:[#allocation9 + $0x1a0] sm:$0xff]
      %v503 = vld [vmem:[#allocation9 + $0x1a8] sm:$0xff]
      %v504 = vld [vmem:[#allocation9 + $0x1b0] sm:$0xff]
      %v505 = vld [vmem:[#allocation9 + $0x1b8] sm:$0xff]
      %v506 = vld [vmem:[#allocation9 + $0x1c0] sm:$0xff]
      %v507 = vld [vmem:[#allocation9 + $0x1c8] sm:$0xff]
      %v508 = vld [vmem:[#allocation9 + $0x1d0] sm:$0xff]
      %v509 = vld [vmem:[#allocation9 + $0x1d8] sm:$0xff]
      %v510 = vld [vmem:[#allocation9 + $0x1e0] sm:$0xff]
      %v511 = vld [vmem:[#allocation9 + $0x1e8] sm:$0xff]
      %v512 = vld [vmem:[#allocation9 + $0x1f0] sm:$0xff]
      %v513 = vld [vmem:[#allocation9 + $0x1f8] sm:$0xff]
      %v514 = vld [vmem:[#allocation9 + $0x200] sm:$0xff]
      %v515 = vld [vmem:[#allocation9 + $0x208] sm:$0xff]
      %v516 = vld [vmem:[#allocation9 + $0x210] sm:$0xff]
      %v517 = vld [vmem:[#allocation9 + $0x218] sm:$0xff]
      %v518 = vld [vmem:[#allocation9 + $0x220] sm:$0xff]
      %v519 = vld [vmem:[#allocation9 + $0x228] sm:$0xff]
      %v520 = vld [vmem:[#allocation9 + $0x230] sm:$0xff]
      %v521 = vld [vmem:[#allocation9 + $0x238] sm:$0xff]
      %v522 = vld [vmem:[#allocation9 + $0x240] sm:$0xff]
      %v523 = vld [vmem:[#allocation9 + $0x248] sm:$0xff]
      %v524 = vld [vmem:[#allocation9 + $0x250] sm:$0xff]
      %v525 = vld [vmem:[#allocation9 + $0x258] sm:$0xff]
      %v526 = vld [vmem:[#allocation9 + $0x260] sm:$0xff]
      %v527 = vld [vmem:[#allocation9 + $0x268] sm:$0xff]
      %v528 = vld [vmem:[#allocation9 + $0x270] sm:$0xff]
      %v529 = vld [vmem:[#allocation9 + $0x278] sm:$0xff]
      %v530 = vld [vmem:[#allocation9 + $0x280] sm:$0xff]
      %v531 = vld [vmem:[#allocation9 + $0x288] sm:$0xff]
      %v532 = vld [vmem:[#allocation9 + $0x290] sm:$0xff]
      %v533 = vld [vmem:[#allocation9 + $0x298] sm:$0xff]
      %v534 = vld [vmem:[#allocation9 + $0x2a0] sm:$0xff]
      %v535 = vld [vmem:[#allocation9 + $0x2a8] sm:$0xff]
      %v536 = vld [vmem:[#allocation9 + $0x2b0] sm:$0xff]
      %v537 = vld [vmem:[#allocation9 + $0x2b8] sm:$0xff]
      %v538 = vld [vmem:[#allocation9 + $0x2c0] sm:$0xff]
      %v539 = vld [vmem:[#allocation9 + $0x2c8] sm:$0xff]
      %v540 = vld [vmem:[#allocation9 + $0x2d0] sm:$0xff]
      %v541 = vld [vmem:[#allocation9 + $0x2d8] sm:$0xff]
      %v542 = vld [vmem:[#allocation9 + $0x2e0] sm:$0xff]
      %v543 = vld [vmem:[#allocation9 + $0x2e8] sm:$0xff]
      %v544 = vld [vmem:[#allocation9 + $0x2f0] sm:$0xff]
      %v545 = vld [vmem:[#allocation9 + $0x2f8] sm:$0xff]
      %v546 = vld [vmem:[#allocation9 + $0x300] sm:$0xff]
      %v547 = vld [vmem:[#allocation9 + $0x308] sm:$0xff]
      %v548 = vld [vmem:[#allocation9 + $0x310] sm:$0xff]
      %v549 = vld [vmem:[#allocation9 + $0x318] sm:$0xff]
      %v550 = vld [vmem:[#allocation9 + $0x320] sm:$0xff]
      %v551 = vld [vmem:[#allocation9 + $0x328] sm:$0xff]
      %v552 = vld [vmem:[#allocation9 + $0x330] sm:$0xff]
      %v553 = vld [vmem:[#allocation9 + $0x338] sm:$0xff]
      %v554 = vld [vmem:[#allocation9 + $0x340] sm:$0xff]
      %v555 = vld [vmem:[#allocation9 + $0x348] sm:$0xff]
      %v556 = vld [vmem:[#allocation9 + $0x350] sm:$0xff]
      %v557 = vld [vmem:[#allocation9 + $0x358] sm:$0xff]
      %v558 = vld [vmem:[#allocation9 + $0x360] sm:$0xff]
      %v559 = vld [vmem:[#allocation9 + $0x368] sm:$0xff]
      %v560 = vld [vmem:[#allocation9 + $0x370] sm:$0xff]
      %v561 = vld [vmem:[#allocation9 + $0x378] sm:$0xff]
      %v562 = vld [vmem:[#allocation9 + $0x380] sm:$0xff]
      %v563 = vld [vmem:[#allocation9 + $0x388] sm:$0xff]
      %v564 = vld [vmem:[#allocation9 + $0x390] sm:$0xff]
      %v565 = vld [vmem:[#allocation9 + $0x398] sm:$0xff]
      %v566 = vld [vmem:[#allocation9 + $0x3a0] sm:$0xff]
      %v567 = vld [vmem:[#allocation9 + $0x3a8] sm:$0xff]
      %v568 = vld [vmem:[#allocation9 + $0x3b0] sm:$0xff]
      %v569 = vld [vmem:[#allocation9 + $0x3b8] sm:$0xff]
      %v570 = vld [vmem:[#allocation9 + $0x3c0] sm:$0xff]
      %v571 = vld [vmem:[#allocation9 + $0x3c8] sm:$0xff]
      %v572 = vld [vmem:[#allocation9 + $0x3d0] sm:$0xff]
      %v573 = vld [vmem:[#allocation9 + $0x3d8] sm:$0xff]
      %v574 = vld [vmem:[#allocation9 + $0x3e0] sm:$0xff]
      %v575 = vld [vmem:[#allocation9 + $0x3e8] sm:$0xff]
      %v576 = vld [vmem:[#allocation9 + $0x3f0] sm:$0xff]
      %v577 = vld [vmem:[#allocation9 + $0x3f8] sm:$0xff]
      %v578 = vld [vmem:[%s4] sm:$0x1]
      %v580 = vperm.slane %v578, 0
      %582 = vmatpush.msra.mxu0 %v465
      %583 = vmatpush.msra.mxu0 %v464
      %584 = vmatpush.msra.mxu0 %v463
      %585 = vmatpush.msra.mxu0 %v462
      %586 = vmatpush.msra.mxu0 %v461
      %587 = vmatpush.msra.mxu0 %v460
      %588 = vmatpush.msra.mxu0 %v459
      %589 = vmatpush.msra.mxu0 %v458
      %590 = vmatpush.msra.mxu0 %v457
      %591 = vmatpush.msra.mxu0 %v456
      %592 = vmatpush.msra.mxu0 %v455
      %593 = vmatpush.msra.mxu0 %v454
      %594 = vmatpush.msra.mxu0 %v453
      %595 = vmatpush.msra.mxu0 %v452
      %596 = vmatpush.msra.mxu0 %v451
      %597 = vmatpush.msra.mxu0 %v450
      %598 = vmatmul.f32.gmra.mxu0 %v442
      %v599 = vpop.f32.mrf.mxu0
      %v600 = vadd.f32 %v580, %v599
      %601 = vdwg.mxu0
      %602 = vmatpush.msra.mxu0 %v481
      %603 = vmatpush.msra.mxu0 %v480
      %604 = vmatpush.msra.mxu0 %v479
      %605 = vmatpush.msra.mxu0 %v478
      %606 = vmatpush.msra.mxu0 %v477
      %607 = vmatpush.msra.mxu0 %v476
      %608 = vmatpush.msra.mxu0 %v475
      %609 = vmatpush.msra.mxu0 %v474
      %610 = vmatpush.msra.mxu0 %v473
      %611 = vmatpush.msra.mxu0 %v472
      %612 = vmatpush.msra.mxu0 %v471
      %613 = vmatpush.msra.mxu0 %v470
      %614 = vmatpush.msra.mxu0 %v469
      %615 = vmatpush.msra.mxu0 %v468
      %616 = vmatpush.msra.mxu0 %v467
      %617 = vmatpush.msra.mxu0 %v466
      %618 = vmatmul.f32.gmra.mxu0 %v443
      %v619 = vpop.f32.mrf.mxu0
      %v620 = vadd.f32 %v600, %v619
      %621 = vdwg.mxu0
      %622 = vmatpush.msra.mxu0 %v497
      %623 = vmatpush.msra.mxu0 %v496
      %624 = vmatpush.msra.mxu0 %v495
      %625 = vmatpush.msra.mxu0 %v494
      %626 = vmatpush.msra.mxu0 %v493
      %627 = vmatpush.msra.mxu0 %v492
      %628 = vmatpush.msra.mxu0 %v491
      %629 = vmatpush.msra.mxu0 %v490
      %630 = vmatpush.msra.mxu0 %v489
      %631 = vmatpush.msra.mxu0 %v488
      %632 = vmatpush.msra.mxu0 %v487
      %633 = vmatpush.msra.mxu0 %v486
      %634 = vmatpush.msra.mxu0 %v485
      %635 = vmatpush.msra.mxu0 %v484
      %636 = vmatpush.msra.mxu0 %v483
      %637 = vmatpush.msra.mxu0 %v482
      %638 = vmatmul.f32.gmra.mxu0 %v444
      %v639 = vpop.f32.mrf.mxu0
      %v640 = vadd.f32 %v620, %v639
      %641 = vdwg.mxu0
      %642 = vmatpush.msra.mxu0 %v513
      %643 = vmatpush.msra.mxu0 %v512
      %644 = vmatpush.msra.mxu0 %v511
      %645 = vmatpush.msra.mxu0 %v510
      %646 = vmatpush.msra.mxu0 %v509
      %647 = vmatpush.msra.mxu0 %v508
      %648 = vmatpush.msra.mxu0 %v507
      %649 = vmatpush.msra.mxu0 %v506
      %650 = vmatpush.msra.mxu0 %v505
      %651 = vmatpush.msra.mxu0 %v504
      %652 = vmatpush.msra.mxu0 %v503
      %653 = vmatpush.msra.mxu0 %v502
      %654 = vmatpush.msra.mxu0 %v501
      %655 = vmatpush.msra.mxu0 %v500
      %656 = vmatpush.msra.mxu0 %v499
      %657 = vmatpush.msra.mxu0 %v498
      %658 = vmatmul.f32.gmra.mxu0 %v445
      %v659 = vpop.f32.mrf.mxu0
      %v660 = vadd.f32 %v640, %v659
      %661 = vdwg.mxu0
      %662 = vmatpush.msra.mxu0 %v529
      %663 = vmatpush.msra.mxu0 %v528
      %664 = vmatpush.msra.mxu0 %v527
      %665 = vmatpush.msra.mxu0 %v526
      %666 = vmatpush.msra.mxu0 %v525
      %667 = vmatpush.msra.mxu0 %v524
      %668 = vmatpush.msra.mxu0 %v523
      %669 = vmatpush.msra.mxu0 %v522
      %670 = vmatpush.msra.mxu0 %v521
      %671 = vmatpush.msra.mxu0 %v520
      %672 = vmatpush.msra.mxu0 %v519
      %673 = vmatpush.msra.mxu0 %v518
      %674 = vmatpush.msra.mxu0 %v517
      %675 = vmatpush.msra.mxu0 %v516
      %676 = vmatpush.msra.mxu0 %v515
      %677 = vmatpush.msra.mxu0 %v514
      %678 = vmatmul.f32.gmra.mxu0 %v446
      %v679 = vpop.f32.mrf.mxu0
      %v680 = vadd.f32 %v660, %v679
      %681 = vdwg.mxu0
      %682 = vmatpush.msra.mxu0 %v545
      %683 = vmatpush.msra.mxu0 %v544
      %684 = vmatpush.msra.mxu0 %v543
      %685 = vmatpush.msra.mxu0 %v542
      %686 = vmatpush.msra.mxu0 %v541
      %687 = vmatpush.msra.mxu0 %v540
      %688 = vmatpush.msra.mxu0 %v539
      %689 = vmatpush.msra.mxu0 %v538
      %690 = vmatpush.msra.mxu0 %v537
      %691 = vmatpush.msra.mxu0 %v536
      %692 = vmatpush.msra.mxu0 %v535
      %693 = vmatpush.msra.mxu0 %v534
      %694 = vmatpush.msra.mxu0 %v533
      %695 = vmatpush.msra.mxu0 %v532
      %696 = vmatpush.msra.mxu0 %v531
      %697 = vmatpush.msra.mxu0 %v530
      %698 = vmatmul.f32.gmra.mxu0 %v447
      %v699 = vpop.f32.mrf.mxu0
      %v700 = vadd.f32 %v680, %v699
      %701 = vdwg.mxu0
      %702 = vmatpush.msra.mxu0 %v561
      %703 = vmatpush.msra.mxu0 %v560
      %704 = vmatpush.msra.mxu0 %v559
      %705 = vmatpush.msra.mxu0 %v558
      %706 = vmatpush.msra.mxu0 %v557
      %707 = vmatpush.msra.mxu0 %v556
      %708 = vmatpush.msra.mxu0 %v555
      %709 = vmatpush.msra.mxu0 %v554
      %710 = vmatpush.msra.mxu0 %v553
      %711 = vmatpush.msra.mxu0 %v552
      %712 = vmatpush.msra.mxu0 %v551
      %713 = vmatpush.msra.mxu0 %v550
      %714 = vmatpush.msra.mxu0 %v549
      %715 = vmatpush.msra.mxu0 %v548
      %716 = vmatpush.msra.mxu0 %v547
      %717 = vmatpush.msra.mxu0 %v546
      %718 = vmatmul.f32.gmra.mxu0 %v448
      %v719 = vpop.f32.mrf.mxu0
      %v720 = vadd.f32 %v700, %v719
      %721 = vdwg.mxu0
      %722 = vmatpush.msra.mxu0 %v577
      %723 = vmatpush.msra.mxu0 %v576
      %724 = vmatpush.msra.mxu0 %v575
      %725 = vmatpush.msra.mxu0 %v574
      %726 = vmatpush.msra.mxu0 %v573
      %727 = vmatpush.msra.mxu0 %v572
      %728 = vmatpush.msra.mxu0 %v571
      %729 = vmatpush.msra.mxu0 %v570
      %730 = vmatpush.msra.mxu0 %v569
      %731 = vmatpush.msra.mxu0 %v568
      %732 = vmatpush.msra.mxu0 %v567
      %733 = vmatpush.msra.mxu0 %v566
      %734 = vmatpush.msra.mxu0 %v565
      %735 = vmatpush.msra.mxu0 %v564
      %736 = vmatpush.msra.mxu0 %v563
      %737 = vmatpush.msra.mxu0 %v562
      %738 = vmatmul.f32.gmra.mxu0 %v449
      %v739 = vpop.f32.mrf.mxu0
      %v740 = vadd.f32 %v720, %v739
      %741 = vdwg.mxu0
      %742 = vst [vmem:[#allocation11] sm:$0xff] %v740
    $region45: #{tpu_custom_call.1} parent=1 // pred_fallthru
      _
    // Predicated region
    $region46: #{tpu_custom_call.1} parent=1 // pred_check
      _
    $region47: #{tpu_custom_call.1} parent=1 // pred_check_branch
      %744 = sbr.rel (0) target = $region49
    $region48: #{tpu_custom_call.1} parent=1 // pred_region
      %746 = vsyncadd [#allocation5], 0
      %s748 = sshll.u32 [#allocation11], 4
      %s749 = int_to_ptr.vmem [resolvable:$true] %s748
      %s750 = sshll.u32 %s5, 4
      %s751 = int_to_ptr.hbm [resolvable:$true] %s750
      %753 = dma.vmem_to_hbm [thread:$0]  %s749, 128, %s751, [#allocation5]
    $region49: #{tpu_custom_call.1} parent=1 // pred_fallthru
      _
    // Predicated region
    $region50: #{tpu_custom_call.1} parent=1 // pred_check
      _
    $region51: #{tpu_custom_call.1} parent=1 // pred_check_branch
      %755 = sbr.rel (0) target = $region53
    $region52: #{tpu_custom_call.1} parent=1 // pred_region
      %757 = dma.done [#allocation5], 128
    $region53: #{tpu_custom_call.1} parent=1 // pred_fallthru
      _
    %758 = vsyncpa [#allocation4], 1
    %759 = vsyncpa [#allocation7], 1
    %760 = vsyncpa [#allocation10], 1
    %761 = vsyncpa [#allocation5], 1

// kernel: tpu_custom_call.1
$region0: #{tpu_custom_call.1}
  #allocation0 [shape = 'u32[]', space=smem, size = 0x4, offset = 0x4, fixed_abs, tag = 'smem constant byte address 0x4 - core index']
  #allocation1 [shape = 'u32[72,128]{1,0:T(1,128)}', space=vmem, size = 0x9000, scoped, tag = 'internal scratch']
  #allocation2 [shape = 'f32[8,1024]{1,0:T(8,128)}', space=vmem, size = 0x8000, scoped, tag = 'scratch operand']
  %s0 = inlined_call_operand.hbm [shape: f32[8,128], index: 0, kind: input, shape index: {}]
  %s1 = inlined_call_operand.hbm [shape: f32[128,1024], index: 1, kind: input, shape index: {}]
  %s2 = inlined_call_operand.hbm [shape: f32[1,1024], index: 2, kind: input, shape index: {}]
  %s3 = inlined_call_operand.hbm [shape: f32[1024,128], index: 3, kind: input, shape index: {}]
  %s4 = inlined_call_operand.vmem [shape: f32[1,128], index: 4, kind: input, shape index: {}]
  %s5 = inlined_call_operand.hbm [shape: f32[8,128], index: 5, kind: output, shape index: {}]
  %s6 = sld [smem:[#allocation0]]
  $region54: #{tpu_custom_call.1} parent=0
    _
  %s8 = ssub.s32 1, %s6
  %s9 = scalar_select 0, %s8, %s6
  $region1: #{tpu_custom_call.1} parent=0
    #allocation3 [shape = 'u8[4096]{0}', space=vmem, size = 0x1000, scoped, tag = 'input window, operand 0, single buffered']
    #allocation4 [shape = 's32[1]{0}', space=sflag, size = 0x4, scoped, tag = 'scoped memory for tpu_custom_call.1']
    #allocation5 [shape = 's32[1]{0}', space=sflag, size = 0x4, scoped, tag = 'scoped memory for tpu_custom_call.1']
    #allocation6 [shape = 'u8[524288]{0}', space=vmem, size = 0x80000, scoped, tag = 'input window, operand 1, single buffered']
    #allocation7 [shape = 's32[1]{0}', space=sflag, size = 0x4, scoped, tag = 'scoped memory for tpu_custom_call.1']
    #allocation8 [shape = 'u8[4096]{0}', space=vmem, size = 0x1000, scoped, tag = 'input window, operand 2, single buffered']
    #allocation9 [shape = 'u8[524288]{0}', space=vmem, size = 0x80000, scoped, tag = 'input window, operand 3, single buffered']
    #allocation10 [shape = 's32[1]{0}', space=sflag, size = 0x4, scoped, tag = 'scoped memory for tpu_custom_call.1']
    #allocation11 [shape = 'u8[4096]{0}', space=vmem, size = 0x1000, scoped, tag = 'output window, operand 0, single buffered']
    %10 = vsyncpa [#allocation4], 0
    %11 = vsyncpa [#allocation7], 0
    %12 = vsyncpa [#allocation10], 0
    %13 = vsyncpa [#allocation5], 0
    // Predicated region
    $region2: #{tpu_custom_call.1} parent=1 // pred_check
      _
    $region3: #{tpu_custom_call.1} parent=1 // pred_check_branch
      %15 = sbr.rel (0) target = $region5
    $region4: #{tpu_custom_call.1} parent=1 // pred_region
      %17 = vsyncadd [#allocation4], 0
      %s19 = sshll.u32 %s0, 4
      %s20 = int_to_ptr.hbm [resolvable:$true] %s19
      %s21 = sshll.u32 [#allocation3], 4
      %s22 = int_to_ptr.vmem [resolvable:$true] %s21
      %24 = dma.hbm_to_vmem [thread:$0]  %s20, 128, %s22, [#allocation4]
    $region5: #{tpu_custom_call.1} parent=1 // pred_fallthru
      _
    // Predicated region
    $region6: #{tpu_custom_call.1} parent=1 // pred_check
      _
    $region7: #{tpu_custom_call.1} parent=1 // pred_check_branch
      %26 = sbr.rel (0) target = $region9
    $region8: #{tpu_custom_call.1} parent=1 // pred_region
      %28 = vsyncadd [#allocation7], 0
      %s29 = sshll.u32 %s1, 4
      %s30 = int_to_ptr.hbm [resolvable:$true] %s29
      %s31 = sshll.u32 [#allocation6], 4
      %s32 = int_to_ptr.vmem [resolvable:$true] %s31
      %37 = dma.hbm_to_vmem [thread:$0]  %s30, 16384, %s32, [#allocation7], 1024, 1024, 64
    $region9: #{tpu_custom_call.1} parent=1 // pred_fallthru
      _
    // Predicated region
    $region10: #{tpu_custom_call.1} parent=1 // pred_check
      _
    $region11: #{tpu_custom_call.1} parent=1 // pred_check_branch
      %39 = sbr.rel (0) target = $region13
    $region12: #{tpu_custom_call.1} parent=1 // pred_region
      %41 = vsyncadd [#allocation7], 0
      %s43 = sshll.u32 %s2, 4
      %s44 = int_to_ptr.hbm [resolvable:$true] %s43
      %s45 = sshll.u32 [#allocation8], 4
      %s46 = int_to_ptr.vmem [resolvable:$true] %s45
      %48 = dma.hbm_to_vmem [thread:$0]  %s44, 128, %s46, [#allocation7]
    $region13: #{tpu_custom_call.1} parent=1 // pred_fallthru
      _
    // Predicated region
    $region14: #{tpu_custom_call.1} parent=1 // pred_check
      _
    $region15: #{tpu_custom_call.1} parent=1 // pred_check_branch
      %50 = sbr.rel (0) target = $region17
    $region16: #{tpu_custom_call.1} parent=1 // pred_region
      %52 = vsyncadd [#allocation10], 0
      %s53 = sshll.u32 %s3, 4
      %s54 = int_to_ptr.hbm [resolvable:$true] %s53
      %s55 = sshll.u32 [#allocation9], 4
      %s56 = int_to_ptr.vmem [resolvable:$true] %s55
      %61 = dma.hbm_to_vmem [thread:$0]  %s54, 16384, %s56, [#allocation10], 128, 128, 8
    $region17: #{tpu_custom_call.1} parent=1 // pred_fallthru
      _
    // Predicated region
    $region18: #{tpu_custom_call.1} parent=1 // pred_check
      _
    $region19: #{tpu_custom_call.1} parent=1 // pred_check_branch
      %63 = sbr.rel (0) target = $region21
    $region20: #{tpu_custom_call.1} parent=1 // pred_region
      _
    $region21: #{tpu_custom_call.1} parent=1 // pred_fallthru
      _
    // Predicated region
    $region22: #{tpu_custom_call.1} parent=1 // pred_check
      _
    $region23: #{tpu_custom_call.1} parent=1 // pred_check_branch
      %65 = sbr.rel (0) target = $region25
    $region24: #{tpu_custom_call.1} parent=1 // pred_region
      %67 = dma.done [#allocation4], 128
    $region25: #{tpu_custom_call.1} parent=1 // pred_fallthru
      _
    // Predicated region
    $region26: #{tpu_custom_call.1} parent=1 // pred_check
      _
    $region27: #{tpu_custom_call.1} parent=1 // pred_check_branch
      %69 = sbr.rel (0) target = $region29
    $region28: #{tpu_custom_call.1} parent=1 // pred_region
      %71 = dma.done [#allocation7], 16384
    $region29: #{tpu_custom_call.1} parent=1 // pred_fallthru
      _
    // Predicated region
    $region30: #{tpu_custom_call.1} parent=1 // pred_check
      _
    $region31: #{tpu_custom_call.1} parent=1 // pred_check_branch
      %73 = sbr.rel (0) target = $region33
    $region32: #{tpu_custom_call.1} parent=1 // pred_region
      %75 = dma.done [#allocation7], 128
    $region33: #{tpu_custom_call.1} parent=1 // pred_fallthru
      _
    // Predicated region
    $region34: #{tpu_custom_call.1} parent=1 // pred_check
      _
    $region35: #{tpu_custom_call.1} parent=1 // pred_check_branch
      %77 = sbr.rel (0) target = $region37
    $region36: #{tpu_custom_call.1} parent=1 // pred_region
      %79 = dma.done [#allocation10], 16384
    $region37: #{tpu_custom_call.1} parent=1 // pred_fallthru
      _
    %p80 = scmp.eq.s32.totalorder 0, 0
    // Predicated region
    $region38: #{tpu_custom_call.1} parent=1 // pred_check
      %p81 = pneg %p80
    $region39: #{tpu_custom_call.1} parent=1 // pred_check_branch
      %83 = sbr.rel (%p81) target = $region41
    $region40: #{tpu_custom_call.1} parent=1 // pred_region
      %84 = vst [vmem:[#allocation2] sm:$0xff] 0.0
      %85 = vst [vmem:[#allocation2 + $0x8] sm:$0xff] 0.0
      %86 = vst [vmem:[#allocation2 + $0x10] sm:$0xff] 0.0
      %87 = vst [vmem:[#allocation2 + $0x18] sm:$0xff] 0.0
      %88 = vst [vmem:[#allocation2 + $0x20] sm:$0xff] 0.0
      %89 = vst [vmem:[#allocation2 + $0x28] sm:$0xff] 0.0
      %90 = vst [vmem:[#allocation2 + $0x30] sm:$0xff] 0.0
      %91 = vst [vmem:[#allocation2 + $0x38] sm:$0xff] 0.0
    $region41: #{tpu_custom_call.1} parent=1 // pred_fallthru
      _
    %v92 = vld [vmem:[#allocation2] sm:$0xff]
    %v93 = vld [vmem:[#allocation2 + $0x8] sm:$0xff]
    %v94 = vld [vmem:[#allocation2 + $0x10] sm:$0xff]
    %v95 = vld [vmem:[#allocation2 + $0x18] sm:$0xff]
    %v96 = vld [vmem:[#allocation2 + $0x20] sm:$0xff]
    %v97 = vld [vmem:[#allocation2 + $0x28] sm:$0xff]
    %v98 = vld [vmem:[#allocation2 + $0x30] sm:$0xff]
    %v99 = vld [vmem:[#allocation2 + $0x38] sm:$0xff]
    %v100 = vld [vmem:[#allocation3] sm:$0xff]
    %v101 = vld [vmem:[#allocation6] sm:$0xff]
    %v102 = vld [vmem:[#allocation6 + $0x8] sm:$0xff]
    %v103 = vld [vmem:[#allocation6 + $0x10] sm:$0xff]
    %v104 = vld [vmem:[#allocation6 + $0x18] sm:$0xff]
    %v105 = vld [vmem:[#allocation6 + $0x20] sm:$0xff]
    %v106 = vld [vmem:[#allocation6 + $0x28] sm:$0xff]
    %v107 = vld [vmem:[#allocation6 + $0x30] sm:$0xff]
    %v108 = vld [vmem:[#allocation6 + $0x38] sm:$0xff]
    %v109 = vld [vmem:[#allocation6 + $0x40] sm:$0xff]
    %v110 = vld [vmem:[#allocation6 + $0x48] sm:$0xff]
    %v111 = vld [vmem:[#allocation6 + $0x50] sm:$0xff]
    %v112 = vld [vmem:[#allocation6 + $0x58] sm:$0xff]
    %v113 = vld [vmem:[#allocation6 + $0x60] sm:$0xff]
    %v114 = vld [vmem:[#allocation6 + $0x68] sm:$0xff]
    %v115 = vld [vmem:[#allocation6 + $0x70] sm:$0xff]
    %v116 = vld [vmem:[#allocation6 + $0x78] sm:$0xff]
    %v117 = vld [vmem:[#allocation6 + $0x80] sm:$0xff]
    %v118 = vld [vmem:[#allocation6 + $0x88] sm:$0xff]
    %v119 = vld [vmem:[#allocation6 + $0x90] sm:$0xff]
    %v120 = vld [vmem:[#allocation6 + $0x98] sm:$0xff]
    %v121 = vld [vmem:[#allocation6 + $0xa0] sm:$0xff]
    %v122 = vld [vmem:[#allocation6 + $0xa8] sm:$0xff]
    %v123 = vld [vmem:[#allocation6 + $0xb0] sm:$0xff]
    %v124 = vld [vmem:[#allocation6 + $0xb8] sm:$0xff]
    %v125 = vld [vmem:[#allocation6 + $0xc0] sm:$0xff]
    %v126 = vld [vmem:[#allocation6 + $0xc8] sm:$0xff]
    %v127 = vld [vmem:[#allocation6 + $0xd0] sm:$0xff]
    %v128 = vld [vmem:[#allocation6 + $0xd8] sm:$0xff]
    %v129 = vld [vmem:[#allocation6 + $0xe0] sm:$0xff]
    %v130 = vld [vmem:[#allocation6 + $0xe8] sm:$0xff]
    %v131 = vld [vmem:[#allocation6 + $0xf0] sm:$0xff]
    %v132 = vld [vmem:[#allocation6 + $0xf8] sm:$0xff]
    %v133 = vld [vmem:[#allocation6 + $0x100] sm:$0xff]
    %v134 = vld [vmem:[#allocation6 + $0x108] sm:$0xff]
    %v135 = vld [vmem:[#allocation6 + $0x110] sm:$0xff]
    %v136 = vld [vmem:[#allocation6 + $0x118] sm:$0xff]
    %v137 = vld [vmem:[#allocation6 + $0x120] sm:$0xff]
    %v138 = vld [vmem:[#allocation6 + $0x128] sm:$0xff]
    %v139 = vld [vmem:[#allocation6 + $0x130] sm:$0xff]
    %v140 = vld [vmem:[#allocation6 + $0x138] sm:$0xff]
    %v141 = vld [vmem:[#allocation6 + $0x140] sm:$0xff]
    %v142 = vld [vmem:[#allocation6 + $0x148] sm:$0xff]
    %v143 = vld [vmem:[#allocation6 + $0x150] sm:$0xff]
    %v144 = vld [vmem:[#allocation6 + $0x158] sm:$0xff]
    %v145 = vld [vmem:[#allocation6 + $0x160] sm:$0xff]
    %v146 = vld [vmem:[#allocation6 + $0x168] sm:$0xff]
    %v147 = vld [vmem:[#allocation6 + $0x170] sm:$0xff]
    %v148 = vld [vmem:[#allocation6 + $0x178] sm:$0xff]
    %v149 = vld [vmem:[#allocation6 + $0x180] sm:$0xff]
    %v150 = vld [vmem:[#allocation6 + $0x188] sm:$0xff]
    %v151 = vld [vmem:[#allocation6 + $0x190] sm:$0xff]
    %v152 = vld [vmem:[#allocation6 + $0x198] sm:$0xff]
    %v153 = vld [vmem:[#allocation6 + $0x1a0] sm:$0xff]
    %v154 = vld [vmem:[#allocation6 + $0x1a8] sm:$0xff]
    %v155 = vld [vmem:[#allocation6 + $0x1b0] sm:$0xff]
    %v156 = vld [vmem:[#allocation6 + $0x1b8] sm:$0xff]
    %v157 = vld [vmem:[#allocation6 + $0x1c0] sm:$0xff]
    %v158 = vld [vmem:[#allocation6 + $0x1c8] sm:$0xff]
    %v159 = vld [vmem:[#allocation6 + $0x1d0] sm:$0xff]
    %v160 = vld [vmem:[#allocation6 + $0x1d8] sm:$0xff]
    %v161 = vld [vmem:[#allocation6 + $0x1e0] sm:$0xff]
    %v162 = vld [vmem:[#allocation6 + $0x1e8] sm:$0xff]
    %v163 = vld [vmem:[#allocation6 + $0x1f0] sm:$0xff]
    %v164 = vld [vmem:[#allocation6 + $0x1f8] sm:$0xff]
    %v165 = vld [vmem:[#allocation6 + $0x200] sm:$0xff]
    %v166 = vld [vmem:[#allocation6 + $0x208] sm:$0xff]
    %v167 = vld [vmem:[#allocation6 + $0x210] sm:$0xff]
    %v168 = vld [vmem:[#allocation6 + $0x218] sm:$0xff]
    %v169 = vld [vmem:[#allocation6 + $0x220] sm:$0xff]
    %v170 = vld [vmem:[#allocation6 + $0x228] sm:$0xff]
    %v171 = vld [vmem:[#allocation6 + $0x230] sm:$0xff]
    %v172 = vld [vmem:[#allocation6 + $0x238] sm:$0xff]
    %v173 = vld [vmem:[#allocation6 + $0x240] sm:$0xff]
    %v174 = vld [vmem:[#allocation6 + $0x248] sm:$0xff]
    %v175 = vld [vmem:[#allocation6 + $0x250] sm:$0xff]
    %v176 = vld [vmem:[#allocation6 + $0x258] sm:$0xff]
    %v177 = vld [vmem:[#allocation6 + $0x260] sm:$0xff]
    %v178 = vld [vmem:[#allocation6 + $0x268] sm:$0xff]
    %v179 = vld [vmem:[#allocation6 + $0x270] sm:$0xff]
    %v180 = vld [vmem:[#allocation6 + $0x278] sm:$0xff]
    %v181 = vld [vmem:[#allocation6 + $0x280] sm:$0xff]
    %v182 = vld [vmem:[#allocation6 + $0x288] sm:$0xff]
    %v183 = vld [vmem:[#allocation6 + $0x290] sm:$0xff]
    %v184 = vld [vmem:[#allocation6 + $0x298] sm:$0xff]
    %v185 = vld [vmem:[#allocation6 + $0x2a0] sm:$0xff]
    %v186 = vld [vmem:[#allocation6 + $0x2a8] sm:$0xff]
    %v187 = vld [vmem:[#allocation6 + $0x2b0] sm:$0xff]
    %v188 = vld [vmem:[#allocation6 + $0x2b8] sm:$0xff]
    %v189 = vld [vmem:[#allocation6 + $0x2c0] sm:$0xff]
    %v190 = vld [vmem:[#allocation6 + $0x2c8] sm:$0xff]
    %v191 = vld [vmem:[#allocation6 + $0x2d0] sm:$0xff]
    %v192 = vld [vmem:[#allocation6 + $0x2d8] sm:$0xff]
    %v193 = vld [vmem:[#allocation6 + $0x2e0] sm:$0xff]
    %v194 = vld [vmem:[#allocation6 + $0x2e8] sm:$0xff]
    %v195 = vld [vmem:[#allocation6 + $0x2f0] sm:$0xff]
    %v196 = vld [vmem:[#allocation6 + $0x2f8] sm:$0xff]
    %v197 = vld [vmem:[#allocation6 + $0x300] sm:$0xff]
    %v198 = vld [vmem:[#allocation6 + $0x308] sm:$0xff]
    %v199 = vld [vmem:[#allocation6 + $0x310] sm:$0xff]
    %v200 = vld [vmem:[#allocation6 + $0x318] sm:$0xff]
    %v201 = vld [vmem:[#allocation6 + $0x320] sm:$0xff]
    %v202 = vld [vmem:[#allocation6 + $0x328] sm:$0xff]
    %v203 = vld [vmem:[#allocation6 + $0x330] sm:$0xff]
    %v204 = vld [vmem:[#allocation6 + $0x338] sm:$0xff]
    %v205 = vld [vmem:[#allocation6 + $0x340] sm:$0xff]
    %v206 = vld [vmem:[#allocation6 + $0x348] sm:$0xff]
    %v207 = vld [vmem:[#allocation6 + $0x350] sm:$0xff]
    %v208 = vld [vmem:[#allocation6 + $0x358] sm:$0xff]
    %v209 = vld [vmem:[#allocation6 + $0x360] sm:$0xff]
    %v210 = vld [vmem:[#allocation6 + $0x368] sm:$0xff]
    %v211 = vld [vmem:[#allocation6 + $0x370] sm:$0xff]
    %v212 = vld [vmem:[#allocation6 + $0x378] sm:$0xff]
    %v213 = vld [vmem:[#allocation6 + $0x380] sm:$0xff]
    %v214 = vld [vmem:[#allocation6 + $0x388] sm:$0xff]
    %v215 = vld [vmem:[#allocation6 + $0x390] sm:$0xff]
    %v216 = vld [vmem:[#allocation6 + $0x398] sm:$0xff]
    %v217 = vld [vmem:[#allocation6 + $0x3a0] sm:$0xff]
    %v218 = vld [vmem:[#allocation6 + $0x3a8] sm:$0xff]
    %v219 = vld [vmem:[#allocation6 + $0x3b0] sm:$0xff]
    %v220 = vld [vmem:[#allocation6 + $0x3b8] sm:$0xff]
    %v221 = vld [vmem:[#allocation6 + $0x3c0] sm:$0xff]
    %v222 = vld [vmem:[#allocation6 + $0x3c8] sm:$0xff]
    %v223 = vld [vmem:[#allocation6 + $0x3d0] sm:$0xff]
    %v224 = vld [vmem:[#allocation6 + $0x3d8] sm:$0xff]
    %v225 = vld [vmem:[#allocation6 + $0x3e0] sm:$0xff]
    %v226 = vld [vmem:[#allocation6 + $0x3e8] sm:$0xff]
    %v227 = vld [vmem:[#allocation6 + $0x3f0] sm:$0xff]
    %v228 = vld [vmem:[#allocation6 + $0x3f8] sm:$0xff]
    %229 = vmatpush.msra.mxu0 %v221
    %230 = vmatpush.msra.mxu0 %v213
    %231 = vmatpush.msra.mxu0 %v205
    %232 = vmatpush.msra.mxu0 %v197
    %233 = vmatpush.msra.mxu0 %v189
    %234 = vmatpush.msra.mxu0 %v181
    %235 = vmatpush.msra.mxu0 %v173
    %236 = vmatpush.msra.mxu0 %v165
    %237 = vmatpush.msra.mxu0 %v157
    %238 = vmatpush.msra.mxu0 %v149
    %239 = vmatpush.msra.mxu0 %v141
    %240 = vmatpush.msra.mxu0 %v133
    %241 = vmatpush.msra.mxu0 %v125
    %242 = vmatpush.msra.mxu0 %v117
    %243 = vmatpush.msra.mxu0 %v109
    %244 = vmatpush.msra.mxu0 %v101
    %245 = vmatmul.f32.gmra.mxu0 %v100
    %v246 = vpop.f32.mrf.mxu0
    %v247 = vadd.f32 0.0, %v246
    %248 = vdwg.mxu0
    %249 = vmatpush.msra.mxu0 %v222
    %250 = vmatpush.msra.mxu0 %v214
    %251 = vmatpush.msra.mxu0 %v206
    %252 = vmatpush.msra.mxu0 %v198
    %253 = vmatpush.msra.mxu0 %v190
    %254 = vmatpush.msra.mxu0 %v182
    %255 = vmatpush.msra.mxu0 %v174
    %256 = vmatpush.msra.mxu0 %v166
    %257 = vmatpush.msra.mxu0 %v158
    %258 = vmatpush.msra.mxu0 %v150
    %259 = vmatpush.msra.mxu0 %v142
    %260 = vmatpush.msra.mxu0 %v134
    %261 = vmatpush.msra.mxu0 %v126
    %262 = vmatpush.msra.mxu0 %v118
    %263 = vmatpush.msra.mxu0 %v110
    %264 = vmatpush.msra.mxu0 %v102
    %265 = vmatmul.f32.gmra.mxu0 %v100
    %v266 = vpop.f32.mrf.mxu0
    %v267 = vadd.f32 0.0, %v266
    %268 = vdwg.mxu0
    %269 = vmatpush.msra.mxu0 %v223
    %270 = vmatpush.msra.mxu0 %v215
    %271 = vmatpush.msra.mxu0 %v207
    %272 = vmatpush.msra.mxu0 %v199
    %273 = vmatpush.msra.mxu0 %v191
    %274 = vmatpush.msra.mxu0 %v183
    %275 = vmatpush.msra.mxu0 %v175
    %276 = vmatpush.msra.mxu0 %v167
    %277 = vmatpush.msra.mxu0 %v159
    %278 = vmatpush.msra.mxu0 %v151
    %279 = vmatpush.msra.mxu0 %v143
    %280 = vmatpush.msra.mxu0 %v135
    %281 = vmatpush.msra.mxu0 %v127
    %282 = vmatpush.msra.mxu0 %v119
    %283 = vmatpush.msra.mxu0 %v111
    %284 = vmatpush.msra.mxu0 %v103
    %285 = vmatmul.f32.gmra.mxu0 %v100
    %v286 = vpop.f32.mrf.mxu0
    %v287 = vadd.f32 0.0, %v286
    %288 = vdwg.mxu0
    %289 = vmatpush.msra.mxu0 %v224
    %290 = vmatpush.msra.mxu0 %v216
    %291 = vmatpush.msra.mxu0 %v208
    %292 = vmatpush.msra.mxu0 %v200
    %293 = vmatpush.msra.mxu0 %v192
    %294 = vmatpush.msra.mxu0 %v184
    %295 = vmatpush.msra.mxu0 %v176
    %296 = vmatpush.msra.mxu0 %v168
    %297 = vmatpush.msra.mxu0 %v160
    %298 = vmatpush.msra.mxu0 %v152
    %299 = vmatpush.msra.mxu0 %v144
    %300 = vmatpush.msra.mxu0 %v136
    %301 = vmatpush.msra.mxu0 %v128
    %302 = vmatpush.msra.mxu0 %v120
    %303 = vmatpush.msra.mxu0 %v112
    %304 = vmatpush.msra.mxu0 %v104
    %305 = vmatmul.f32.gmra.mxu0 %v100
    %v306 = vpop.f32.mrf.mxu0
    %v307 = vadd.f32 0.0, %v306
    %308 = vdwg.mxu0
    %309 = vmatpush.msra.mxu0 %v225
    %310 = vmatpush.msra.mxu0 %v217
    %311 = vmatpush.msra.mxu0 %v209
    %312 = vmatpush.msra.mxu0 %v201
    %313 = vmatpush.msra.mxu0 %v193
    %314 = vmatpush.msra.mxu0 %v185
    %315 = vmatpush.msra.mxu0 %v177
    %316 = vmatpush.msra.mxu0 %v169
    %317 = vmatpush.msra.mxu0 %v161
    %318 = vmatpush.msra.mxu0 %v153
    %319 = vmatpush.msra.mxu0 %v145
    %320 = vmatpush.msra.mxu0 %v137
    %321 = vmatpush.msra.mxu0 %v129
    %322 = vmatpush.msra.mxu0 %v121
    %323 = vmatpush.msra.mxu0 %v113
    %324 = vmatpush.msra.mxu0 %v105
    %325 = vmatmul.f32.gmra.mxu0 %v100
    %v326 = vpop.f32.mrf.mxu0
    %v327 = vadd.f32 0.0, %v326
    %328 = vdwg.mxu0
    %329 = vmatpush.msra.mxu0 %v226
    %330 = vmatpush.msra.mxu0 %v218
    %331 = vmatpush.msra.mxu0 %v210
    %332 = vmatpush.msra.mxu0 %v202
    %333 = vmatpush.msra.mxu0 %v194
    %334 = vmatpush.msra.mxu0 %v186
    %335 = vmatpush.msra.mxu0 %v178
    %336 = vmatpush.msra.mxu0 %v170
    %337 = vmatpush.msra.mxu0 %v162
    %338 = vmatpush.msra.mxu0 %v154
    %339 = vmatpush.msra.mxu0 %v146
    %340 = vmatpush.msra.mxu0 %v138
    %341 = vmatpush.msra.mxu0 %v130
    %342 = vmatpush.msra.mxu0 %v122
    %343 = vmatpush.msra.mxu0 %v114
    %344 = vmatpush.msra.mxu0 %v106
    %345 = vmatmul.f32.gmra.mxu0 %v100
    %v346 = vpop.f32.mrf.mxu0
    %v347 = vadd.f32 0.0, %v346
    %348 = vdwg.mxu0
    %349 = vmatpush.msra.mxu0 %v227
    %350 = vmatpush.msra.mxu0 %v219
    %351 = vmatpush.msra.mxu0 %v211
    %352 = vmatpush.msra.mxu0 %v203
    %353 = vmatpush.msra.mxu0 %v195
    %354 = vmatpush.msra.mxu0 %v187
    %355 = vmatpush.msra.mxu0 %v179
    %356 = vmatpush.msra.mxu0 %v171
    %357 = vmatpush.msra.mxu0 %v163
    %358 = vmatpush.msra.mxu0 %v155
    %359 = vmatpush.msra.mxu0 %v147
    %360 = vmatpush.msra.mxu0 %v139
    %361 = vmatpush.msra.mxu0 %v131
    %362 = vmatpush.msra.mxu0 %v123
    %363 = vmatpush.msra.mxu0 %v115
    %364 = vmatpush.msra.mxu0 %v107
    %365 = vmatmul.f32.gmra.mxu0 %v100
    %v366 = vpop.f32.mrf.mxu0
    %v367 = vadd.f32 0.0, %v366
    %368 = vdwg.mxu0
    %369 = vmatpush.msra.mxu0 %v228
    %370 = vmatpush.msra.mxu0 %v220
    %371 = vmatpush.msra.mxu0 %v212
    %372 = vmatpush.msra.mxu0 %v204
    %373 = vmatpush.msra.mxu0 %v196
    %374 = vmatpush.msra.mxu0 %v188
    %375 = vmatpush.msra.mxu0 %v180
    %376 = vmatpush.msra.mxu0 %v172
    %377 = vmatpush.msra.mxu0 %v164
    %378 = vmatpush.msra.mxu0 %v156
    %379 = vmatpush.msra.mxu0 %v148
    %380 = vmatpush.msra.mxu0 %v140
    %381 = vmatpush.msra.mxu0 %v132
    %382 = vmatpush.msra.mxu0 %v124
    %383 = vmatpush.msra.mxu0 %v116
    %384 = vmatpush.msra.mxu0 %v108
    %385 = vmatmul.f32.gmra.mxu0 %v100
    %v386 = vpop.f32.mrf.mxu0
    %v387 = vadd.f32 0.0, %v386
    %388 = vdwg.mxu0
    %v389 = vadd.f32 %v92, %v247
    %v390 = vadd.f32 %v93, %v267
    %v391 = vadd.f32 %v94, %v287
    %v392 = vadd.f32 %v95, %v307
    %v393 = vadd.f32 %v96, %v327
    %v394 = vadd.f32 %v97, %v347
    %v395 = vadd.f32 %v98, %v367
    %v396 = vadd.f32 %v99, %v387
    %397 = vst [vmem:[#allocation2] sm:$0xff] %v389
    %398 = vst [vmem:[#allocation2 + $0x8] sm:$0xff] %v390
    %399 = vst [vmem:[#allocation2 + $0x10] sm:$0xff] %v391
    %400 = vst [vmem:[#allocation2 + $0x18] sm:$0xff] %v392
    %401 = vst [vmem:[#allocation2 + $0x20] sm:$0xff] %v393
    %402 = vst [vmem:[#allocation2 + $0x28] sm:$0xff] %v394
    %403 = vst [vmem:[#allocation2 + $0x30] sm:$0xff] %v395
    %404 = vst [vmem:[#allocation2 + $0x38] sm:$0xff] %v396
    // Predicated region
    $region42: #{tpu_custom_call.1} parent=1 // pred_check
      %p405 = pneg %p80
    $region43: #{tpu_custom_call.1} parent=1 // pred_check_branch
      %407 = sbr.rel (%p405) target = $region45
    $region44: #{tpu_custom_call.1} parent=1 // pred_region
      %v408 = vld [vmem:[#allocation2] sm:$0xff]
      %v409 = vld [vmem:[#allocation2 + $0x8] sm:$0xff]
      %v410 = vld [vmem:[#allocation2 + $0x10] sm:$0xff]
      %v411 = vld [vmem:[#allocation2 + $0x18] sm:$0xff]
      %v412 = vld [vmem:[#allocation2 + $0x20] sm:$0xff]
      %v413 = vld [vmem:[#allocation2 + $0x28] sm:$0xff]
      %v414 = vld [vmem:[#allocation2 + $0x30] sm:$0xff]
      %v415 = vld [vmem:[#allocation2 + $0x38] sm:$0xff]
      %v416 = vld [vmem:[#allocation8] sm:$0xff]
      %v418 = vperm.slane %v416, 0
      %v419 = vperm.slane %v416, 1
      %v420 = vperm.slane %v416, 2
      %v421 = vperm.slane %v416, 3
      %v422 = vperm.slane %v416, 4
      %v423 = vperm.slane %v416, 5
      %v424 = vperm.slane %v416, 6
      %v425 = vperm.slane %v416, 7
      %v434 = vadd.f32 %v408, %v418
      %v435 = vadd.f32 %v409, %v419
      %v436 = vadd.f32 %v410, %v420
      %v437 = vadd.f32 %v411, %v421
      %v438 = vadd.f32 %v412, %v422
      %v439 = vadd.f32 %v413, %v423
      %v440 = vadd.f32 %v414, %v424
      %v441 = vadd.f32 %v415, %v425
      %v442 = vmax.f32 %v434, 0.0
      %v443 = vmax.f32 %v435, 0.0
      %v444 = vmax.f32 %v436, 0.0
      %v445 = vmax.f32 %v437, 0.0
      %v446 = vmax.f32 %v438, 0.0
      %v447 = vmax.f32 %v439, 0.0
      %v448 = vmax.f32 %v440, 0.0
      %v449 = vmax.f32 %v441, 0.0
      %v450 = vld [vmem:[#allocation9] sm:$0xff]
      %v451 = vld [vmem:[#allocation9 + $0x8] sm:$0xff]
      %v452 = vld [vmem:[#allocation9 + $0x10] sm:$0xff]
      %v453 = vld [vmem:[#allocation9 + $0x18] sm:$0xff]
      %v454 = vld [vmem:[#allocation9 + $0x20] sm:$0xff]
      %v455 = vld [vmem:[#allocation9 + $0x28] sm:$0xff]
      %v456 = vld [vmem:[#allocation9 + $0x30] sm:$0xff]
      %v457 = vld [vmem:[#allocation9 + $0x38] sm:$0xff]
      %v458 = vld [vmem:[#allocation9 + $0x40] sm:$0xff]
      %v459 = vld [vmem:[#allocation9 + $0x48] sm:$0xff]
      %v460 = vld [vmem:[#allocation9 + $0x50] sm:$0xff]
      %v461 = vld [vmem:[#allocation9 + $0x58] sm:$0xff]
      %v462 = vld [vmem:[#allocation9 + $0x60] sm:$0xff]
      %v463 = vld [vmem:[#allocation9 + $0x68] sm:$0xff]
      %v464 = vld [vmem:[#allocation9 + $0x70] sm:$0xff]
      %v465 = vld [vmem:[#allocation9 + $0x78] sm:$0xff]
      %v466 = vld [vmem:[#allocation9 + $0x80] sm:$0xff]
      %v467 = vld [vmem:[#allocation9 + $0x88] sm:$0xff]
      %v468 = vld [vmem:[#allocation9 + $0x90] sm:$0xff]
      %v469 = vld [vmem:[#allocation9 + $0x98] sm:$0xff]
      %v470 = vld [vmem:[#allocation9 + $0xa0] sm:$0xff]
      %v471 = vld [vmem:[#allocation9 + $0xa8] sm:$0xff]
      %v472 = vld [vmem:[#allocation9 + $0xb0] sm:$0xff]
      %v473 = vld [vmem:[#allocation9 + $0xb8] sm:$0xff]
      %v474 = vld [vmem:[#allocation9 + $0xc0] sm:$0xff]
      %v475 = vld [vmem:[#allocation9 + $0xc8] sm:$0xff]
      %v476 = vld [vmem:[#allocation9 + $0xd0] sm:$0xff]
      %v477 = vld [vmem:[#allocation9 + $0xd8] sm:$0xff]
      %v478 = vld [vmem:[#allocation9 + $0xe0] sm:$0xff]
      %v479 = vld [vmem:[#allocation9 + $0xe8] sm:$0xff]
      %v480 = vld [vmem:[#allocation9 + $0xf0] sm:$0xff]
      %v481 = vld [vmem:[#allocation9 + $0xf8] sm:$0xff]
      %v482 = vld [vmem:[#allocation9 + $0x100] sm:$0xff]
      %v483 = vld [vmem:[#allocation9 + $0x108] sm:$0xff]
      %v484 = vld [vmem:[#allocation9 + $0x110] sm:$0xff]
      %v485 = vld [vmem:[#allocation9 + $0x118] sm:$0xff]
      %v486 = vld [vmem:[#allocation9 + $0x120] sm:$0xff]
      %v487 = vld [vmem:[#allocation9 + $0x128] sm:$0xff]
      %v488 = vld [vmem:[#allocation9 + $0x130] sm:$0xff]
      %v489 = vld [vmem:[#allocation9 + $0x138] sm:$0xff]
      %v490 = vld [vmem:[#allocation9 + $0x140] sm:$0xff]
      %v491 = vld [vmem:[#allocation9 + $0x148] sm:$0xff]
      %v492 = vld [vmem:[#allocation9 + $0x150] sm:$0xff]
      %v493 = vld [vmem:[#allocation9 + $0x158] sm:$0xff]
      %v494 = vld [vmem:[#allocation9 + $0x160] sm:$0xff]
      %v495 = vld [vmem:[#allocation9 + $0x168] sm:$0xff]
      %v496 = vld [vmem:[#allocation9 + $0x170] sm:$0xff]
      %v497 = vld [vmem:[#allocation9 + $0x178] sm:$0xff]
      %v498 = vld [vmem:[#allocation9 + $0x180] sm:$0xff]
      %v499 = vld [vmem:[#allocation9 + $0x188] sm:$0xff]
      %v500 = vld [vmem:[#allocation9 + $0x190] sm:$0xff]
      %v501 = vld [vmem:[#allocation9 + $0x198] sm:$0xff]
      %v502 = vld [vmem:[#allocation9 + $0x1a0] sm:$0xff]
      %v503 = vld [vmem:[#allocation9 + $0x1a8] sm:$0xff]
      %v504 = vld [vmem:[#allocation9 + $0x1b0] sm:$0xff]
      %v505 = vld [vmem:[#allocation9 + $0x1b8] sm:$0xff]
      %v506 = vld [vmem:[#allocation9 + $0x1c0] sm:$0xff]
      %v507 = vld [vmem:[#allocation9 + $0x1c8] sm:$0xff]
      %v508 = vld [vmem:[#allocation9 + $0x1d0] sm:$0xff]
      %v509 = vld [vmem:[#allocation9 + $0x1d8] sm:$0xff]
      %v510 = vld [vmem:[#allocation9 + $0x1e0] sm:$0xff]
      %v511 = vld [vmem:[#allocation9 + $0x1e8] sm:$0xff]
      %v512 = vld [vmem:[#allocation9 + $0x1f0] sm:$0xff]
      %v513 = vld [vmem:[#allocation9 + $0x1f8] sm:$0xff]
      %v514 = vld [vmem:[#allocation9 + $0x200] sm:$0xff]
      %v515 = vld [vmem:[#allocation9 + $0x208] sm:$0xff]
      %v516 = vld [vmem:[#allocation9 + $0x210] sm:$0xff]
      %v517 = vld [vmem:[#allocation9 + $0x218] sm:$0xff]
      %v518 = vld [vmem:[#allocation9 + $0x220] sm:$0xff]
      %v519 = vld [vmem:[#allocation9 + $0x228] sm:$0xff]
      %v520 = vld [vmem:[#allocation9 + $0x230] sm:$0xff]
      %v521 = vld [vmem:[#allocation9 + $0x238] sm:$0xff]
      %v522 = vld [vmem:[#allocation9 + $0x240] sm:$0xff]
      %v523 = vld [vmem:[#allocation9 + $0x248] sm:$0xff]
      %v524 = vld [vmem:[#allocation9 + $0x250] sm:$0xff]
      %v525 = vld [vmem:[#allocation9 + $0x258] sm:$0xff]
      %v526 = vld [vmem:[#allocation9 + $0x260] sm:$0xff]
      %v527 = vld [vmem:[#allocation9 + $0x268] sm:$0xff]
      %v528 = vld [vmem:[#allocation9 + $0x270] sm:$0xff]
      %v529 = vld [vmem:[#allocation9 + $0x278] sm:$0xff]
      %v530 = vld [vmem:[#allocation9 + $0x280] sm:$0xff]
      %v531 = vld [vmem:[#allocation9 + $0x288] sm:$0xff]
      %v532 = vld [vmem:[#allocation9 + $0x290] sm:$0xff]
      %v533 = vld [vmem:[#allocation9 + $0x298] sm:$0xff]
      %v534 = vld [vmem:[#allocation9 + $0x2a0] sm:$0xff]
      %v535 = vld [vmem:[#allocation9 + $0x2a8] sm:$0xff]
      %v536 = vld [vmem:[#allocation9 + $0x2b0] sm:$0xff]
      %v537 = vld [vmem:[#allocation9 + $0x2b8] sm:$0xff]
      %v538 = vld [vmem:[#allocation9 + $0x2c0] sm:$0xff]
      %v539 = vld [vmem:[#allocation9 + $0x2c8] sm:$0xff]
      %v540 = vld [vmem:[#allocation9 + $0x2d0] sm:$0xff]
      %v541 = vld [vmem:[#allocation9 + $0x2d8] sm:$0xff]
      %v542 = vld [vmem:[#allocation9 + $0x2e0] sm:$0xff]
      %v543 = vld [vmem:[#allocation9 + $0x2e8] sm:$0xff]
      %v544 = vld [vmem:[#allocation9 + $0x2f0] sm:$0xff]
      %v545 = vld [vmem:[#allocation9 + $0x2f8] sm:$0xff]
      %v546 = vld [vmem:[#allocation9 + $0x300] sm:$0xff]
      %v547 = vld [vmem:[#allocation9 + $0x308] sm:$0xff]
      %v548 = vld [vmem:[#allocation9 + $0x310] sm:$0xff]
      %v549 = vld [vmem:[#allocation9 + $0x318] sm:$0xff]
      %v550 = vld [vmem:[#allocation9 + $0x320] sm:$0xff]
      %v551 = vld [vmem:[#allocation9 + $0x328] sm:$0xff]
      %v552 = vld [vmem:[#allocation9 + $0x330] sm:$0xff]
      %v553 = vld [vmem:[#allocation9 + $0x338] sm:$0xff]
      %v554 = vld [vmem:[#allocation9 + $0x340] sm:$0xff]
      %v555 = vld [vmem:[#allocation9 + $0x348] sm:$0xff]
      %v556 = vld [vmem:[#allocation9 + $0x350] sm:$0xff]
      %v557 = vld [vmem:[#allocation9 + $0x358] sm:$0xff]
      %v558 = vld [vmem:[#allocation9 + $0x360] sm:$0xff]
      %v559 = vld [vmem:[#allocation9 + $0x368] sm:$0xff]
      %v560 = vld [vmem:[#allocation9 + $0x370] sm:$0xff]
      %v561 = vld [vmem:[#allocation9 + $0x378] sm:$0xff]
      %v562 = vld [vmem:[#allocation9 + $0x380] sm:$0xff]
      %v563 = vld [vmem:[#allocation9 + $0x388] sm:$0xff]
      %v564 = vld [vmem:[#allocation9 + $0x390] sm:$0xff]
      %v565 = vld [vmem:[#allocation9 + $0x398] sm:$0xff]
      %v566 = vld [vmem:[#allocation9 + $0x3a0] sm:$0xff]
      %v567 = vld [vmem:[#allocation9 + $0x3a8] sm:$0xff]
      %v568 = vld [vmem:[#allocation9 + $0x3b0] sm:$0xff]
      %v569 = vld [vmem:[#allocation9 + $0x3b8] sm:$0xff]
      %v570 = vld [vmem:[#allocation9 + $0x3c0] sm:$0xff]
      %v571 = vld [vmem:[#allocation9 + $0x3c8] sm:$0xff]
      %v572 = vld [vmem:[#allocation9 + $0x3d0] sm:$0xff]
      %v573 = vld [vmem:[#allocation9 + $0x3d8] sm:$0xff]
      %v574 = vld [vmem:[#allocation9 + $0x3e0] sm:$0xff]
      %v575 = vld [vmem:[#allocation9 + $0x3e8] sm:$0xff]
      %v576 = vld [vmem:[#allocation9 + $0x3f0] sm:$0xff]
      %v577 = vld [vmem:[#allocation9 + $0x3f8] sm:$0xff]
      %v578 = vld [vmem:[%s4] sm:$0x1]
      %v580 = vperm.slane %v578, 0
      %582 = vmatpush.msra.mxu0 %v465
      %583 = vmatpush.msra.mxu0 %v464
      %584 = vmatpush.msra.mxu0 %v463
      %585 = vmatpush.msra.mxu0 %v462
      %586 = vmatpush.msra.mxu0 %v461
      %587 = vmatpush.msra.mxu0 %v460
      %588 = vmatpush.msra.mxu0 %v459
      %589 = vmatpush.msra.mxu0 %v458
      %590 = vmatpush.msra.mxu0 %v457
      %591 = vmatpush.msra.mxu0 %v456
      %592 = vmatpush.msra.mxu0 %v455
      %593 = vmatpush.msra.mxu0 %v454
      %594 = vmatpush.msra.mxu0 %v453
      %595 = vmatpush.msra.mxu0 %v452
      %596 = vmatpush.msra.mxu0 %v451
      %597 = vmatpush.msra.mxu0 %v450
      %598 = vmatmul.f32.gmra.mxu0 %v442
      %v599 = vpop.f32.mrf.mxu0
      %v600 = vadd.f32 %v580, %v599
      %601 = vdwg.mxu0
      %602 = vmatpush.msra.mxu0 %v481
      %603 = vmatpush.msra.mxu0 %v480
      %604 = vmatpush.msra.mxu0 %v479
      %605 = vmatpush.msra.mxu0 %v478
      %606 = vmatpush.msra.mxu0 %v477
      %607 = vmatpush.msra.mxu0 %v476
      %608 = vmatpush.msra.mxu0 %v475
      %609 = vmatpush.msra.mxu0 %v474
      %610 = vmatpush.msra.mxu0 %v473
      %611 = vmatpush.msra.mxu0 %v472
      %612 = vmatpush.msra.mxu0 %v471
      %613 = vmatpush.msra.mxu0 %v470
      %614 = vmatpush.msra.mxu0 %v469
      %615 = vmatpush.msra.mxu0 %v468
      %616 = vmatpush.msra.mxu0 %v467
      %617 = vmatpush.msra.mxu0 %v466
      %618 = vmatmul.f32.gmra.mxu0 %v443
      %v619 = vpop.f32.mrf.mxu0
      %v620 = vadd.f32 %v600, %v619
      %621 = vdwg.mxu0
      %622 = vmatpush.msra.mxu0 %v497
      %623 = vmatpush.msra.mxu0 %v496
      %624 = vmatpush.msra.mxu0 %v495
      %625 = vmatpush.msra.mxu0 %v494
      %626 = vmatpush.msra.mxu0 %v493
      %627 = vmatpush.msra.mxu0 %v492
      %628 = vmatpush.msra.mxu0 %v491
      %629 = vmatpush.msra.mxu0 %v490
      %630 = vmatpush.msra.mxu0 %v489
      %631 = vmatpush.msra.mxu0 %v488
      %632 = vmatpush.msra.mxu0 %v487
      %633 = vmatpush.msra.mxu0 %v486
      %634 = vmatpush.msra.mxu0 %v485
      %635 = vmatpush.msra.mxu0 %v484
      %636 = vmatpush.msra.mxu0 %v483
      %637 = vmatpush.msra.mxu0 %v482
      %638 = vmatmul.f32.gmra.mxu0 %v444
      %v639 = vpop.f32.mrf.mxu0
      %v640 = vadd.f32 %v620, %v639
      %641 = vdwg.mxu0
      %642 = vmatpush.msra.mxu0 %v513
      %643 = vmatpush.msra.mxu0 %v512
      %644 = vmatpush.msra.mxu0 %v511
      %645 = vmatpush.msra.mxu0 %v510
      %646 = vmatpush.msra.mxu0 %v509
      %647 = vmatpush.msra.mxu0 %v508
      %648 = vmatpush.msra.mxu0 %v507
      %649 = vmatpush.msra.mxu0 %v506
      %650 = vmatpush.msra.mxu0 %v505
      %651 = vmatpush.msra.mxu0 %v504
      %652 = vmatpush.msra.mxu0 %v503
      %653 = vmatpush.msra.mxu0 %v502
      %654 = vmatpush.msra.mxu0 %v501
      %655 = vmatpush.msra.mxu0 %v500
      %656 = vmatpush.msra.mxu0 %v499
      %657 = vmatpush.msra.mxu0 %v498
      %658 = vmatmul.f32.gmra.mxu0 %v445
      %v659 = vpop.f32.mrf.mxu0
      %v660 = vadd.f32 %v640, %v659
      %661 = vdwg.mxu0
      %662 = vmatpush.msra.mxu0 %v529
      %663 = vmatpush.msra.mxu0 %v528
      %664 = vmatpush.msra.mxu0 %v527
      %665 = vmatpush.msra.mxu0 %v526
      %666 = vmatpush.msra.mxu0 %v525
      %667 = vmatpush.msra.mxu0 %v524
      %668 = vmatpush.msra.mxu0 %v523
      %669 = vmatpush.msra.mxu0 %v522
      %670 = vmatpush.msra.mxu0 %v521
      %671 = vmatpush.msra.mxu0 %v520
      %672 = vmatpush.msra.mxu0 %v519
      %673 = vmatpush.msra.mxu0 %v518
      %674 = vmatpush.msra.mxu0 %v517
      %675 = vmatpush.msra.mxu0 %v516
      %676 = vmatpush.msra.mxu0 %v515
      %677 = vmatpush.msra.mxu0 %v514
      %678 = vmatmul.f32.gmra.mxu0 %v446
      %v679 = vpop.f32.mrf.mxu0
      %v680 = vadd.f32 %v660, %v679
      %681 = vdwg.mxu0
      %682 = vmatpush.msra.mxu0 %v545
      %683 = vmatpush.msra.mxu0 %v544
      %684 = vmatpush.msra.mxu0 %v543
      %685 = vmatpush.msra.mxu0 %v542
      %686 = vmatpush.msra.mxu0 %v541
      %687 = vmatpush.msra.mxu0 %v540
      %688 = vmatpush.msra.mxu0 %v539
      %689 = vmatpush.msra.mxu0 %v538
      %690 = vmatpush.msra.mxu0 %v537
      %691 = vmatpush.msra.mxu0 %v536
      %692 = vmatpush.msra.mxu0 %v535
      %693 = vmatpush.msra.mxu0 %v534
      %694 = vmatpush.msra.mxu0 %v533
      %695 = vmatpush.msra.mxu0 %v532
      %696 = vmatpush.msra.mxu0 %v531
      %697 = vmatpush.msra.mxu0 %v530
      %698 = vmatmul.f32.gmra.mxu0 %v447
      %v699 = vpop.f32.mrf.mxu0
      %v700 = vadd.f32 %v680, %v699
      %701 = vdwg.mxu0
      %702 = vmatpush.msra.mxu0 %v561
      %703 = vmatpush.msra.mxu0 %v560
      %704 = vmatpush.msra.mxu0 %v559
      %705 = vmatpush.msra.mxu0 %v558
      %706 = vmatpush.msra.mxu0 %v557
      %707 = vmatpush.msra.mxu0 %v556
      %708 = vmatpush.msra.mxu0 %v555
      %709 = vmatpush.msra.mxu0 %v554
      %710 = vmatpush.msra.mxu0 %v553
      %711 = vmatpush.msra.mxu0 %v552
      %712 = vmatpush.msra.mxu0 %v551
      %713 = vmatpush.msra.mxu0 %v550
      %714 = vmatpush.msra.mxu0 %v549
      %715 = vmatpush.msra.mxu0 %v548
      %716 = vmatpush.msra.mxu0 %v547
      %717 = vmatpush.msra.mxu0 %v546
      %718 = vmatmul.f32.gmra.mxu0 %v448
      %v719 = vpop.f32.mrf.mxu0
      %v720 = vadd.f32 %v700, %v719
      %721 = vdwg.mxu0
      %722 = vmatpush.msra.mxu0 %v577
      %723 = vmatpush.msra.mxu0 %v576
      %724 = vmatpush.msra.mxu0 %v575
      %725 = vmatpush.msra.mxu0 %v574
      %726 = vmatpush.msra.mxu0 %v573
      %727 = vmatpush.msra.mxu0 %v572
      %728 = vmatpush.msra.mxu0 %v571
      %729 = vmatpush.msra.mxu0 %v570
      %730 = vmatpush.msra.mxu0 %v569
      %731 = vmatpush.msra.mxu0 %v568
      %732 = vmatpush.msra.mxu0 %v567
      %733 = vmatpush.msra.mxu0 %v566
      %734 = vmatpush.msra.mxu0 %v565
      %735 = vmatpush.msra.mxu0 %v564
      %736 = vmatpush.msra.mxu0 %v563
      %737 = vmatpush.msra.mxu0 %v562
      %738 = vmatmul.f32.gmra.mxu0 %v449
      %v739 = vpop.f32.mrf.mxu0
      %v740 = vadd.f32 %v720, %v739
      %741 = vdwg.mxu0
      %742 = vst [vmem:[#allocation11] sm:$0xff] %v740
    $region45: #{tpu_custom_call.1} parent=1 // pred_fallthru
      _
    // Predicated region
    $region46: #{tpu_custom_call.1} parent=1 // pred_check
      _
    $region47: #{tpu_custom_call.1} parent=1 // pred_check_branch
      %744 = sbr.rel (0) target = $region49
    $region48: #{tpu_custom_call.1} parent=1 // pred_region
      %746 = vsyncadd [#allocation5], 0
      %s748 = sshll.u32 [#allocation11], 4
      %s749 = int_to_ptr.vmem [resolvable:$true] %s748
      %s750 = sshll.u32 %s5, 4
      %s751 = int_to_ptr.hbm [resolvable:$true] %s750
      %753 = dma.vmem_to_hbm [thread:$0]  %s749, 128, %s751, [#allocation5]
    $region49: #{tpu_custom_call.1} parent=1 // pred_fallthru
      _
    // Predicated region
    $region50: #{tpu_custom_call.1} parent=1 // pred_check
      _
    $region51: #{tpu_custom_call.1} parent=1 // pred_check_branch
      %755 = sbr.rel (0) target = $region53
    $region52: #{tpu_custom_call.1} parent=1 // pred_region
      %757 = dma.done [#allocation5], 128
    $region53: #{tpu_custom_call.1} parent=1 // pred_fallthru
      _
    %758 = vsyncpa [#allocation4], 1
    %759 = vsyncpa [#allocation7], 1
    %760 = vsyncpa [#allocation10], 1
    %761 = vsyncpa [#allocation5], 1

</llo_original>
